<compile_context>
chip_gen: v6e
topology: v6e:2x2x1
jax: 0.10.0
libtpu: 0.0.40
codegen_flags: <defaults>
</compile_context>

<pallas_src>
import numpy as np
import jax
import jax.numpy as jnp
from jax.experimental import pallas as pl
from jax.experimental.pallas import tpu as pltpu


def _round_up(v, m):
    return (v + m - 1) // m * m


# ----------------------------------------------------------------------------
# Pallas kernels
# ----------------------------------------------------------------------------
def _pw_conv_bn_relu_kernel(x_ref, w_ref, b_ref, o_ref):
    # One pyramid branch per grid step (grid=(n_branches,), "parallel").
    # x_ref: (1, M, Cin) bf16      w_ref: (1, Cin, Cout_pad) bf16 (BN folded)
    # b_ref: (1, 1, Cout_pad) f32  o_ref: (1, M, Cout_pad) f32 (lane-dense)
    y = jnp.dot(x_ref[0], w_ref[0], preferred_element_type=jnp.float32)
    o_ref[0] = jnp.maximum(y + b_ref[0], 0.0)


def _conv3x3_bn_relu_kernel(xp_ref, w_ref, b_ref, o_ref):
    # xp_ref: (1, H+2, Wp, Fp) bf16 -- concatenated feature map, spatially
    #         padded by the 3x3 halo, W padded to a sublane multiple, channels
    #         zero-padded to Fp (lane multiple).
    # w_ref : (9*Fp, Cout_pad) bf16 -- folded-BN weights; row block t=ky*3+kx
    #         matches im2col column block t.
    # b_ref : (1, Cout_pad) f32
    # o_ref : (1, H, W, Cout_pad) f32 -- lane-dense (Cout padded to 128).
    H, W, Cop = o_ref.shape[1], o_ref.shape[2], o_ref.shape[3]
    Fp = xp_ref.shape[3]
    x = xp_ref[0]                                      # (H+2, Wp, Fp) bf16

    # Build the three W-shifted views ONCE and reuse them for all three ky
    # offsets (ky offsets are leading-dim slices = cheap tile selects). This
    # replaces 9 per-tap misaligned sublane slices with 3 shifted views.
    shifted = [x[:, kx:kx + W, :] for kx in range(3)]   # each (H+2, W, Fp)

    cols = []
    for ky in range(3):
        for kx in range(3):
            cols.append(shifted[kx][ky:ky + H].reshape(H * W, Fp))
    # Lane-aligned concat (Fp % 128 == 0) -> im2col patch matrix.
    patch = jnp.concatenate(cols, axis=-1)              # (H*W, 9*Fp) bf16

    # Single fused K = 9*Fp matmul on the MXU, bf16 operands, f32 accumulate.
    acc = jnp.dot(patch, w_ref[...], preferred_element_type=jnp.float32)
    y = jnp.maximum(acc + b_ref[...], 0.0)
    o_ref[...] = y.reshape(1, H, W, Cop)


# ----------------------------------------------------------------------------
# Pallas call wrappers
# ----------------------------------------------------------------------------
def pointwise_conv_bn_relu(x_stack, w_stack, b_stack):
    # x_stack: (n_br, M, Cin) bf16, w_stack: (n_br, Cin, Cop) bf16,
    # b_stack: (n_br, 1, Cop) f32 -> (n_br, M, Cop) f32
    n_br, M, Cin = x_stack.shape
    Cop = w_stack.shape[-1]
    return pl.pallas_call(
        _pw_conv_bn_relu_kernel,
        out_shape=jax.ShapeDtypeStruct((n_br, M, Cop), jnp.float32),
        grid=(n_br,),
        in_specs=[
            pl.BlockSpec((1, M, Cin), lambda i: (i, 0, 0)),
            pl.BlockSpec((1, Cin, Cop), lambda i: (i, 0, 0)),
            pl.BlockSpec((1, 1, Cop), lambda i: (i, 0, 0)),
        ],
        out_specs=pl.BlockSpec((1, M, Cop), lambda i: (i, 0, 0)),
        compiler_params=pltpu.CompilerParams(dimension_semantics=("parallel",)),
    )(x_stack, w_stack, b_stack)


def conv3x3_bn_relu(xcat, w9, b9, H, W):
    # xcat: (N, H+2, Wp, Fp) bf16 (already halo-padded), w9: (9*Fp, Cop) bf16,
    # b9: (1, Cop) f32 -> (N, H, W, Cop) f32
    N, Hp2, Wp, Fp = xcat.shape
    Cop = w9.shape[-1]
    return pl.pallas_call(
        _conv3x3_bn_relu_kernel,
        out_shape=jax.ShapeDtypeStruct((N, H, W, Cop), jnp.float32),
        grid=(N,),
        in_specs=[
            pl.BlockSpec((1, Hp2, Wp, Fp), lambda n: (n, 0, 0, 0)),
            pl.BlockSpec((9 * Fp, Cop), lambda n: (0, 0)),
            pl.BlockSpec((1, Cop), lambda n: (0, 0)),
        ],
        out_specs=pl.BlockSpec((1, H, W, Cop), lambda n: (n, 0, 0, 0)),
        compiler_params=pltpu.CompilerParams(
            dimension_semantics=("parallel",),
            vmem_limit_bytes=32 * 1024 * 1024,
        ),
    )(xcat, w9, b9)


# ----------------------------------------------------------------------------
# Bilinear resize (exact torch F.interpolate bilinear, align_corners=False)
# expressed as precomputed interpolation matrices (JAX/host glue).
# ----------------------------------------------------------------------------
def bilinear_matrix(in_size, out_size):
    if out_size == in_size:
        return jnp.eye(in_size, dtype=jnp.float32)
    scale = in_size / out_size
    i = np.arange(out_size)
    src = (i + 0.5) * scale - 0.5
    src = np.maximum(src, 0.0)                       # torch clamps negative src to 0
    x0 = np.minimum(np.floor(src).astype(np.int64), in_size - 1)
    x1 = np.minimum(x0 + 1, in_size - 1)
    l1 = src - x0
    l0 = 1.0 - l1
    R = np.zeros((out_size, in_size), dtype=np.float32)
    R[i, x0] += l0
    R[i, x1] += l1
    return jnp.asarray(R)


# ----------------------------------------------------------------------------
# Parameter init (deterministic; BatchNorm folded in inference mode)
# Weights are stored pre-folded, lane-padded (Cout -> 128, F -> Fp) and cast
# to bf16; biases stay f32.
# ----------------------------------------------------------------------------
def init_params(key, in_channels, channels, scale_series, eps=1e-5):
    n = len(scale_series)
    F = in_channels + channels * n
    Fp = _round_up(F, 128)
    Cop = _round_up(channels, 128)
    keys = jax.random.split(key, 2 * n + 2)

    pw_w = jnp.zeros((n, in_channels, Cop), jnp.float32)
    pw_b = jnp.zeros((n, 1, Cop), jnp.float32)
    for i in range(n):
        w = 0.1 * jax.random.normal(keys[2 * i], (in_channels, channels), jnp.float32)
        gamma = 1.0 + 0.1 * jax.random.normal(keys[2 * i + 1], (channels,), jnp.float32)
        beta = 0.05 * jnp.arange(channels, dtype=jnp.float32)
        mean = jnp.zeros((channels,), jnp.float32)
        var = jnp.ones((channels,), jnp.float32)
        scale = gamma / jnp.sqrt(var + eps)
        pw_w = pw_w.at[i, :, :channels].set(w * scale[None, :])
        pw_b = pw_b.at[i, 0, :channels].set(beta - mean * scale)

    # torch weight (Cout, Cin_total, 3, 3) equivalent, generated as (3,3,F,Cout)
    w_out = 0.05 * jax.random.normal(keys[-2], (3, 3, F, channels), jnp.float32)
    gamma_o = 1.0 + 0.1 * jax.random.normal(keys[-1], (channels,), jnp.float32)
    beta_o = jnp.zeros((channels,), jnp.float32)
    mean_o = jnp.zeros((channels,), jnp.float32)
    var_o = jnp.ones((channels,), jnp.float32)
    scale_o = gamma_o / jnp.sqrt(var_o + eps)
    w_out = w_out * scale_o[None, None, None, :]

    w_full = jnp.zeros((3, 3, Fp, Cop), jnp.float32)
    w_full = w_full.at[:, :, :F, :channels].set(w_out)
    out_b = jnp.zeros((1, Cop), jnp.float32).at[0, :channels].set(beta_o - mean_o * scale_o)

    return {
        'pw_w': pw_w.astype(jnp.bfloat16),                      # (n, Cin, Cop)
        'pw_b': pw_b,                                           # (n, 1, Cop) f32
        'out_w': w_full.reshape(9 * Fp, Cop).astype(jnp.bfloat16),
        'out_b': out_b,                                         # (1, Cop) f32
    }


# ----------------------------------------------------------------------------
# PSPP forward
# ----------------------------------------------------------------------------
def pspp_forward(params, x_nchw, scale_series, channels):
    x = jnp.transpose(x_nchw, (0, 2, 3, 1)).astype(jnp.float32)   # NHWC
    N, H, W, Cin = x.shape
    n_br = len(scale_series)
    F = Cin + channels * n_br
    Fp = _round_up(F, 128)
    Wp = _round_up(W + 2, 8)          # sublane-aligned padded width

    # Per-branch shrink. The torch-side zero pad is folded into the downsample
    # matrix columns; the post-upsample crop, the 3x3 halo pad and the W
    # alignment pad are folded into the upsample matrix rows, so no padded or
    # oversized intermediate is ever materialized.
    branch_geom = []
    smalls = []
    for s in scale_series:
        # Keep PyTorch's exact (float-division) shrink-size formula.
        sh = max(1, int((H - 1) / s + 1))
        sw = max(1, int((W - 1) / s + 1))
        pad_h = sh * s - H
        pad_w = sw * s - W
        ph0, pw0 = pad_h // 2, pad_w // 2
        Dh = bilinear_matrix(H + pad_h, sh)[:, ph0:ph0 + H]        # (sh, H)
        Dw = bilinear_matrix(W + pad_w, sw)[:, pw0:pw0 + W]        # (sw, W)
        Uh = bilinear_matrix(sh, sh * s)[ph0:ph0 + H, :]           # (H, sh)  crop folded
        Uw = bilinear_matrix(sw, sw * s)[pw0:pw0 + W, :]           # (W, sw)  crop folded
        Uh = jnp.pad(Uh, ((1, 1), (0, 0)))                         # 3x3 halo rows
        Uw = jnp.pad(Uw, ((1, 1 + Wp - (W + 2)), (0, 0)))          # halo + sublane align
        smalls.append(jnp.einsum('sh,tw,nhwc->nstc', Dh, Dw, x))   # (N, sh, sw, Cin)
        branch_geom.append((Uh, Uw, sh, sw))

    # All 1x1 conv + BN + ReLU branches in a single pallas_call.
    Ms = [N * sh * sw for (_, _, sh, sw) in branch_geom]
    M_max = _round_up(max(Ms), 8)
    x_stack = jnp.stack([
        jnp.pad(sm.reshape(-1, Cin), ((0, M_max - m), (0, 0)))
        for sm, m in zip(smalls, Ms)
    ]).astype(jnp.bfloat16)                                        # (n_br, M_max, Cin)
    y_stack = pointwise_conv_bn_relu(x_stack, params['pw_w'], params['pw_b'])

    # Upsample+crop+halo-pad each branch with tiny einsums, then build the
    # concatenated 3x3-conv input exactly once, in bf16, already padded.
    pieces = [jnp.pad(x, ((0, 0), (1, 1), (1, Wp - W - 1), (0, 0))).astype(jnp.bfloat16)]
    for i, (Uh, Uw, sh, sw) in enumerate(branch_geom):
        y = y_stack[i, :Ms[i], :channels].reshape(N, sh, sw, channels)
        up = jnp.einsum('hs,wt,nstc->nhwc', Uh, Uw, y)             # (N, H+2, Wp, channels)
        pieces.append(up.astype(jnp.bfloat16))
    if Fp > F:
        pieces.append(jnp.zeros((N, H + 2, Wp, Fp - F), jnp.bfloat16))
    xcat = jnp.concatenate(pieces, axis=-1)                        # (N, H+2, Wp, Fp)

    # Fused 3x3 conv + BN + ReLU (Pallas, lane-dense padded output).
    out_pad = conv3x3_bn_relu(xcat, params['out_w'], params['out_b'], H, W)
    out = out_pad[..., :channels]
    return jnp.transpose(out, (0, 3, 1, 2))                        # NCHW


if __name__ == "__main__":
    key = jax.random.PRNGKey(0)
    k_x, k_p = jax.random.split(key)

    N, Cin, H, W = 2, 4, 16, 16
    channels = 8
    scale_series = [10, 20, 30, 60]

    x = jax.random.normal(k_x, (N, Cin, H, W), jnp.float32)
    params = init_params(k_p, Cin, channels, scale_series)

    fwd = jax.jit(lambda p, xx: pspp_forward(p, xx, scale_series, channels))
    out = fwd(params, x)
    out = jax.block_until_ready(out)

    assert out.shape == (N, channels, H, W), out.shape
    assert bool(jnp.all(jnp.isfinite(out)))
    assert bool(jnp.all(out >= 0.0))  # final ReLU
    print("KERNEL_OK")
</pallas_src>

<mosaic_0001>
module attributes {stable_mosaic.version = 11 : i64} {
  func.func @_pw_conv_bn_relu_kernel(%arg0: i32, %arg1: memref<1x8x4xbf16, #tpu.memory_space<vmem>>, %arg2: memref<1x4x128xbf16, #tpu.memory_space<vmem>>, %arg3: memref<1x1x128xf32, #tpu.memory_space<vmem>>, %arg4: memref<1x8x128xf32, #tpu.memory_space<vmem>>) attributes {dimension_semantics = [#tpu.dimension_semantics<parallel>], iteration_bounds = array<i64: 4>, scalar_prefetch = 0 : i64, scratch_operands = 0 : i64, tpu.core_type = #tpu.core_type<tc>, window_params = [{transform_indices = @transform_0, window_bounds = array<i64: 1, 8, 4>}, {transform_indices = @transform_1, window_bounds = array<i64: 1, 4, 128>}, {transform_indices = @transform_2, window_bounds = array<i64: 1, 1, 128>}, {transform_indices = @transform_3, window_bounds = array<i64: 1, 8, 128>}]} {
    %c0 = arith.constant 0 : index
    %c0_0 = arith.constant 0 : index
    %c0_1 = arith.constant 0 : index
    %0 = vector.load %arg1[%c0, %c0_0, %c0_1] : memref<1x8x4xbf16, #tpu.memory_space<vmem>>, vector<1x8x4xbf16>
    %1 = vector.shape_cast %0 : vector<1x8x4xbf16> to vector<8x4xbf16>
    %c0_2 = arith.constant 0 : index
    %c0_3 = arith.constant 0 : index
    %c0_4 = arith.constant 0 : index
    %2 = vector.load %arg2[%c0_2, %c0_3, %c0_4] : memref<1x4x128xbf16, #tpu.memory_space<vmem>>, vector<1x4x128xbf16>
    %3 = vector.shape_cast %2 : vector<1x4x128xbf16> to vector<4x128xbf16>
    %cst = arith.constant dense<0.000000e+00> : vector<8x128xf32>
    %4 = tpu.matmul %1, %3, %cst {dimension_numbers = #tpu.dot_dimension_numbers<[1], [0], [0], [1], [0, 0, 1, 1], [], []>} : vector<8x4xbf16>, vector<4x128xbf16>, vector<8x128xf32> -> vector<8x128xf32>
    %c0_5 = arith.constant 0 : index
    %c0_6 = arith.constant 0 : index
    %c0_7 = arith.constant 0 : index
    %5 = vector.load %arg3[%c0_5, %c0_6, %c0_7] : memref<1x1x128xf32, #tpu.memory_space<vmem>>, vector<1x1x128xf32>
    %6 = vector.shape_cast %5 : vector<1x1x128xf32> to vector<1x128xf32>
    %7 = vector.broadcast %6 : vector<1x128xf32> to vector<8x128xf32>
    %8 = arith.addf %4, %7 : vector<8x128xf32>
    %cst_8 = arith.constant 0.000000e+00 : f32
    %9 = vector.broadcast %cst_8 : f32 to vector<8x128xf32>
    %10 = arith.maximumf %8, %9 : vector<8x128xf32>
    %c0_9 = arith.constant 0 : index
    %c0_10 = arith.constant 0 : index
    %c0_11 = arith.constant 0 : index
    %11 = vector.load %arg4[%c0_9, %c0_10, %c0_11] : memref<1x8x128xf32, #tpu.memory_space<vmem>>, vector<1x8x128xf32>
    %12 = vector.shape_cast %11 : vector<1x8x128xf32> to vector<8x128xf32>
    %13 = vector.shape_cast %10 : vector<8x128xf32> to vector<1x8x128xf32>
    tpu.vector_store %arg4[%c0_9, %c0_10, %c0_11], %13 {strides = array<i32>} : memref<1x8x128xf32, #tpu.memory_space<vmem>>, vector<1x8x128xf32>,
    return
  }
  func.func @transform_0(%arg0: i32) -> (i32, i32, i32) {
    %c0_i32 = arith.constant 0 : i32
    %c0_i32_0 = arith.constant 0 : i32
    %c0_i32_1 = arith.constant 0 : i32
    return %arg0, %c0_i32, %c0_i32_0 : i32, i32, i32
  }
  func.func @transform_1(%arg0: i32) -> (i32, i32, i32) {
    %c0_i32 = arith.constant 0 : i32
    %c0_i32_0 = arith.constant 0 : i32
    %c0_i32_1 = arith.constant 0 : i32
    return %arg0, %c0_i32, %c0_i32_0 : i32, i32, i32
  }
  func.func @transform_2(%arg0: i32) -> (i32, i32, i32) {
    %c0_i32 = arith.constant 0 : i32
    %c0_i32_0 = arith.constant 0 : i32
    %c0_i32_1 = arith.constant 0 : i32
    return %arg0, %c0_i32, %c0_i32_0 : i32, i32, i32
  }
  func.func @transform_3(%arg0: i32) -> (i32, i32, i32) {
    %c0_i32 = arith.constant 0 : i32
    %c0_i32_0 = arith.constant 0 : i32
    %c0_i32_1 = arith.constant 0 : i32
    return %arg0, %c0_i32, %c0_i32_0 : i32, i32, i32
  }
}

module attributes {stable_mosaic.version = 11 : i64} {
  func.func @_conv3x3_bn_relu_kernel(%arg0: i32, %arg1: memref<1x18x24x128xbf16, #tpu.memory_space<vmem>>, %arg2: memref<1152x128xbf16, #tpu.memory_space<vmem>>, %arg3: memref<1x128xf32, #tpu.memory_space<vmem>>, %arg4: memref<1x16x16x128xf32, #tpu.memory_space<vmem>>) attributes {dimension_semantics = [#tpu.dimension_semantics<parallel>], iteration_bounds = array<i64: 2>, scalar_prefetch = 0 : i64, scratch_operands = 0 : i64, tpu.core_type = #tpu.core_type<tc>, window_params = [{transform_indices = @transform_0, window_bounds = array<i64: 1, 18, 24, 128>}, {pipeline_mode = #tpu.pipeline_mode<synchronous>, transform_indices = @transform_1, window_bounds = array<i64: 1152, 128>}, {pipeline_mode = #tpu.pipeline_mode<synchronous>, transform_indices = @transform_2, window_bounds = array<i64: 1, 128>}, {transform_indices = @transform_3, window_bounds = array<i64: 1, 16, 16, 128>}]} {
    %c0 = arith.constant 0 : index
    %c0_0 = arith.constant 0 : index
    %c0_1 = arith.constant 0 : index
    %c0_2 = arith.constant 0 : index
    %0 = vector.load %arg1[%c0, %c0_0, %c0_1, %c0_2] : memref<1x18x24x128xbf16, #tpu.memory_space<vmem>>, vector<1x18x24x128xbf16>
    %1 = vector.shape_cast %0 : vector<1x18x24x128xbf16> to vector<18x24x128xbf16>
    %2 = vector.extract_strided_slice %1 {offsets = [0, 0, 0], sizes = [18, 16, 128], strides = [1, 1, 1]} : vector<18x24x128xbf16> to vector<18x16x128xbf16>
    %3 = vector.extract_strided_slice %1 {offsets = [0, 1, 0], sizes = [18, 16, 128], strides = [1, 1, 1]} : vector<18x24x128xbf16> to vector<18x16x128xbf16>
    %4 = vector.extract_strided_slice %1 {offsets = [0, 2, 0], sizes = [18, 16, 128], strides = [1, 1, 1]} : vector<18x24x128xbf16> to vector<18x16x128xbf16>
    %5 = vector.extract_strided_slice %2 {offsets = [0, 0, 0], sizes = [16, 16, 128], strides = [1, 1, 1]} : vector<18x16x128xbf16> to vector<16x16x128xbf16>
    %6 = vector.shape_cast %5 : vector<16x16x128xbf16> to vector<256x128xbf16>
    %7 = vector.extract_strided_slice %3 {offsets = [0, 0, 0], sizes = [16, 16, 128], strides = [1, 1, 1]} : vector<18x16x128xbf16> to vector<16x16x128xbf16>
    %8 = vector.shape_cast %7 : vector<16x16x128xbf16> to vector<256x128xbf16>
    %9 = vector.extract_strided_slice %4 {offsets = [0, 0, 0], sizes = [16, 16, 128], strides = [1, 1, 1]} : vector<18x16x128xbf16> to vector<16x16x128xbf16>
    %10 = vector.shape_cast %9 : vector<16x16x128xbf16> to vector<256x128xbf16>
    %11 = vector.extract_strided_slice %2 {offsets = [1, 0, 0], sizes = [16, 16, 128], strides = [1, 1, 1]} : vector<18x16x128xbf16> to vector<16x16x128xbf16>
    %12 = vector.shape_cast %11 : vector<16x16x128xbf16> to vector<256x128xbf16>
    %13 = vector.extract_strided_slice %3 {offsets = [1, 0, 0], sizes = [16, 16, 128], strides = [1, 1, 1]} : vector<18x16x128xbf16> to vector<16x16x128xbf16>
    %14 = vector.shape_cast %13 : vector<16x16x128xbf16> to vector<256x128xbf16>
    %15 = vector.extract_strided_slice %4 {offsets = [1, 0, 0], sizes = [16, 16, 128], strides = [1, 1, 1]} : vector<18x16x128xbf16> to vector<16x16x128xbf16>
    %16 = vector.shape_cast %15 : vector<16x16x128xbf16> to vector<256x128xbf16>
    %17 = vector.extract_strided_slice %2 {offsets = [2, 0, 0], sizes = [16, 16, 128], strides = [1, 1, 1]} : vector<18x16x128xbf16> to vector<16x16x128xbf16>
    %18 = vector.shape_cast %17 : vector<16x16x128xbf16> to vector<256x128xbf16>
    %19 = vector.extract_strided_slice %3 {offsets = [2, 0, 0], sizes = [16, 16, 128], strides = [1, 1, 1]} : vector<18x16x128xbf16> to vector<16x16x128xbf16>
    %20 = vector.shape_cast %19 : vector<16x16x128xbf16> to vector<256x128xbf16>
    %21 = vector.extract_strided_slice %4 {offsets = [2, 0, 0], sizes = [16, 16, 128], strides = [1, 1, 1]} : vector<18x16x128xbf16> to vector<16x16x128xbf16>
    %22 = vector.shape_cast %21 : vector<16x16x128xbf16> to vector<256x128xbf16>
    %23 = tpu.concatenate %6, %8, %10, %12, %14, %16, %18, %20, %22 in 1 : vector<256x128xbf16>, vector<256x128xbf16>, vector<256x128xbf16>, vector<256x128xbf16>, vector<256x128xbf16>, vector<256x128xbf16>, vector<256x128xbf16>, vector<256x128xbf16>, vector<256x128xbf16> -> vector<256x1152xbf16>
    %c0_3 = arith.constant 0 : index
    %c0_4 = arith.constant 0 : index
    %24 = vector.load %arg2[%c0_3, %c0_4] : memref<1152x128xbf16, #tpu.memory_space<vmem>>, vector<1152x128xbf16>
    %cst = arith.constant dense<0.000000e+00> : vector<256x128xf32>
    %25 = tpu.matmul %23, %24, %cst {dimension_numbers = #tpu.dot_dimension_numbers<[1], [0], [0], [1], [0, 0, 1, 1], [], []>} : vector<256x1152xbf16>, vector<1152x128xbf16>, vector<256x128xf32> -> vector<256x128xf32>
    %c0_5 = arith.constant 0 : index
    %c0_6 = arith.constant 0 : index
    %26 = vector.load %arg3[%c0_5, %c0_6] : memref<1x128xf32, #tpu.memory_space<vmem>>, vector<1x128xf32>
    %27 = vector.broadcast %26 : vector<1x128xf32> to vector<256x128xf32>
    %28 = arith.addf %25, %27 : vector<256x128xf32>
    %cst_7 = arith.constant 0.000000e+00 : f32
    %29 = vector.broadcast %cst_7 : f32 to vector<256x128xf32>
    %30 = arith.maximumf %28, %29 : vector<256x128xf32>
    %31 = vector.shape_cast %30 : vector<256x128xf32> to vector<1x16x16x128xf32>
    %c0_8 = arith.constant 0 : index
    %c0_9 = arith.constant 0 : index
    %c0_10 = arith.constant 0 : index
    %c0_11 = arith.constant 0 : index
    %32 = vector.load %arg4[%c0_8, %c0_9, %c0_10, %c0_11] : memref<1x16x16x128xf32, #tpu.memory_space<vmem>>, vector<1x16x16x128xf32>
    tpu.vector_store %arg4[%c0_8, %c0_9, %c0_10, %c0_11], %31 {strides = array<i32>} : memref<1x16x16x128xf32, #tpu.memory_space<vmem>>, vector<1x16x16x128xf32>,
    return
  }
  func.func @transform_0(%arg0: i32) -> (i32, i32, i32, i32) {
    %c0_i32 = arith.constant 0 : i32
    %c0_i32_0 = arith.constant 0 : i32
    %c0_i32_1 = arith.constant 0 : i32
    %c0_i32_2 = arith.constant 0 : i32
    return %arg0, %c0_i32, %c0_i32_0, %c0_i32_1 : i32, i32, i32, i32
  }
  func.func @transform_1(%arg0: i32) -> (i32, i32) {
    %c0_i32 = arith.constant 0 : i32
    %c0_i32_0 = arith.constant 0 : i32
    %c0_i32_1 = arith.constant 0 : i32
    return %c0_i32, %c0_i32_0 : i32, i32
  }
  func.func @transform_2(%arg0: i32) -> (i32, i32) {
    %c0_i32 = arith.constant 0 : i32
    %c0_i32_0 = arith.constant 0 : i32
    %c0_i32_1 = arith.constant 0 : i32
    return %c0_i32, %c0_i32_0 : i32, i32
  }
  func.func @transform_3(%arg0: i32) -> (i32, i32, i32, i32) {
    %c0_i32 = arith.constant 0 : i32
    %c0_i32_0 = arith.constant 0 : i32
    %c0_i32_1 = arith.constant 0 : i32
    %c0_i32_2 = arith.constant 0 : i32
    return %arg0, %c0_i32, %c0_i32_0, %c0_i32_1 : i32, i32, i32, i32
  }
}

</mosaic_0001>

<llo_original>
// kernel: _lambda_.2
$region0: #{_lambda_.2}
  #allocation0 [shape = 'u32[]', space=smem, size = 0x4, offset = 0x4, fixed_abs, tag = 'smem constant byte address 0x4 - core index']
  #allocation1 [shape = 'u32[144,128]{1,0:T(1,128)}', space=vmem, size = 0x12000, scoped, tag = 'internal scratch']
  %s0 = inlined_call_operand.vmem [shape: bf16[4,8,4], index: 0, kind: input, shape index: {}]
  %s1 = inlined_call_operand.vmem [shape: bf16[4,4,128], index: 1, kind: input, shape index: {}]
  %s2 = inlined_call_operand.vmem [shape: f32[4,1,128], index: 2, kind: input, shape index: {}]
  %s3 = inlined_call_operand.vmem [shape: f32[4,8,128], index: 3, kind: output, shape index: {}]
  %s4 = sld [smem:[#allocation0]]
  $region45: #{_lambda_.2} parent=0
    _
  %s6 = ssub.s32 1, %s4
  %s7 = scalar_select 0, %s6, %s4
  loop: start=0, step=1, limit=6
  $region2: #{_lambda_.2} parent=0 // loop_pre_header
    _
  $region3: #{_lambda_.2} parent=0 // loop_header
    %s9 = sphi 0, %s13
    %p10 = scmp.ge.s32.totalorder %s9, 6
    %s19 = sphi 0, %s21
    %s22 = sphi 0, %s19
    %s23 = sphi 0, %s22
    %s39 = sphi 0, %s23
    %s45 = sphi 0, %s47
    %s48 = sphi 0, %s45
    %s49 = sphi 0, %s48
    %s65 = sphi 0, %s49
    %s71 = sphi 0, %s73
    %s74 = sphi 0, %s71
    %s75 = sphi 0, %s74
    %s91 = sphi 0, %s75
    %s97 = sphi 0, %s99
    %s100 = sphi 0, %s97
    %s101 = sphi 0, %s100
    %s117 = sphi 0, %s101
  $region4: #{_lambda_.2} parent=0 // loop_header_branch
    %12 = sbr.rel (%p10) target = $region8
  $region5: #{_lambda_.2} parent=0 // loop_body
    %s14 = ssub.s32 %s9, 1
    %s15 = ssub.s32 %s9, 2
    %s16 = sadd.s32 %s9, 1
    %s17 = ssub.s32 %s9, %s16
    %p18 = scmp.eq.s32.totalorder %s17, 0
    %s20 = sadd.s32 %s19, 1
    %s21 = scalar_select %p18, %s19, %s20
    %p24 = pneg %p18
    %p25 = scmp.eq.s32.totalorder %s9, 3
    %p26 = por %p24, %p25
    %p27 = scmp.ne.s32.totalorder %s19, %s22
    %p28 = scmp.eq.s32.totalorder %s9, 0
    %p29 = por %p27, %p28
    %p30 = scmp.ne.s32.totalorder %s19, %s22
    %p31 = scmp.eq.s32.totalorder %s14, 3
    %p32 = por %p30, %p31
    %p33 = scmp.ne.s32.totalorder %s22, %s23
    %p34 = scmp.eq.s32.totalorder %s14, 0
    %p35 = por %p33, %p34
    %p36 = scmp.ne.s32.totalorder %s22, %s23
    %p37 = scmp.eq.s32.totalorder %s15, 3
    %p38 = por %p36, %p37
    %p40 = scmp.ne.s32.totalorder %s23, %s39
    %p41 = scmp.eq.s32.totalorder %s15, 0
    %p42 = por %p40, %p41
    %s43 = ssub.s32 %s9, %s16
    %p44 = scmp.eq.s32.totalorder %s43, 0
    %s46 = sadd.s32 %s45, 1
    %s47 = scalar_select %p44, %s45, %s46
    %p50 = pneg %p44
    %p51 = scmp.eq.s32.totalorder %s9, 3
    %p52 = por %p50, %p51
    %p53 = scmp.ne.s32.totalorder %s45, %s48
    %p54 = scmp.eq.s32.totalorder %s9, 0
    %p55 = por %p53, %p54
    %p56 = scmp.ne.s32.totalorder %s45, %s48
    %p57 = scmp.eq.s32.totalorder %s14, 3
    %p58 = por %p56, %p57
    %p59 = scmp.ne.s32.totalorder %s48, %s49
    %p60 = scmp.eq.s32.totalorder %s14, 0
    %p61 = por %p59, %p60
    %p62 = scmp.ne.s32.totalorder %s48, %s49
    %p63 = scmp.eq.s32.totalorder %s15, 3
    %p64 = por %p62, %p63
    %p66 = scmp.ne.s32.totalorder %s49, %s65
    %p67 = scmp.eq.s32.totalorder %s15, 0
    %p68 = por %p66, %p67
    %s69 = ssub.s32 %s9, %s16
    %p70 = scmp.eq.s32.totalorder %s69, 0
    %s72 = sadd.s32 %s71, 1
    %s73 = scalar_select %p70, %s71, %s72
    %p76 = pneg %p70
    %p77 = scmp.eq.s32.totalorder %s9, 3
    %p78 = por %p76, %p77
    %p79 = scmp.ne.s32.totalorder %s71, %s74
    %p80 = scmp.eq.s32.totalorder %s9, 0
    %p81 = por %p79, %p80
    %p82 = scmp.ne.s32.totalorder %s71, %s74
    %p83 = scmp.eq.s32.totalorder %s14, 3
    %p84 = por %p82, %p83
    %p85 = scmp.ne.s32.totalorder %s74, %s75
    %p86 = scmp.eq.s32.totalorder %s14, 0
    %p87 = por %p85, %p86
    %p88 = scmp.ne.s32.totalorder %s74, %s75
    %p89 = scmp.eq.s32.totalorder %s15, 3
    %p90 = por %p88, %p89
    %p92 = scmp.ne.s32.totalorder %s75, %s91
    %p93 = scmp.eq.s32.totalorder %s15, 0
    %p94 = por %p92, %p93
    %s95 = ssub.s32 %s9, %s16
    %p96 = scmp.eq.s32.totalorder %s95, 0
    %s98 = sadd.s32 %s97, 1
    %s99 = scalar_select %p96, %s97, %s98
    %p102 = pneg %p96
    %p103 = scmp.eq.s32.totalorder %s9, 3
    %p104 = por %p102, %p103
    %p105 = scmp.ne.s32.totalorder %s97, %s100
    %p106 = scmp.eq.s32.totalorder %s9, 0
    %p107 = por %p105, %p106
    %p108 = scmp.ne.s32.totalorder %s97, %s100
    %p109 = scmp.eq.s32.totalorder %s14, 3
    %p110 = por %p108, %p109
    %p111 = scmp.ne.s32.totalorder %s100, %s101
    %p112 = scmp.eq.s32.totalorder %s14, 0
    %p113 = por %p111, %p112
    %p114 = scmp.ne.s32.totalorder %s100, %s101
    %p115 = scmp.eq.s32.totalorder %s15, 3
    %p116 = por %p114, %p115
    %p118 = scmp.ne.s32.totalorder %s101, %s117
    %p119 = scmp.eq.s32.totalorder %s15, 0
    %p120 = por %p118, %p119
    %p121 = scmp.le.s32.totalorder 1, %s9
    %p122 = scmp.lt.s32.totalorder %s9, 5
    %p123 = pnand %p121, %p122
    %p124 = pneg %p123
    // Predicated region
    $region9: #{_lambda_.2} parent=5 // pred_check
      _
    $region10: #{_lambda_.2} parent=5 // pred_check_branch
      %126 = sbr.rel (%p123) target = $region12
    $region11: #{_lambda_.2} parent=5 // pred_region
      %s127 = ssub.s32 %s9, 1
    $region12: #{_lambda_.2} parent=5 // pred_fallthru
      _
    %p128 = scmp.lt.s32.totalorder %s9, 4
    // Predicated region
    $region13: #{_lambda_.2} parent=5 // pred_check
      %p129 = pneg %p128
    $region14: #{_lambda_.2} parent=5 // pred_check_branch
      %131 = sbr.rel (%p129) target = $region16
    $region15: #{_lambda_.2} parent=5 // pred_region
      // Predicated region
      $region17: #{_lambda_.2} parent=15 // pred_check
        %p132 = pneg %p29
      $region18: #{_lambda_.2} parent=15 // pred_check_branch
        %134 = sbr.rel (%p132) target = $region20
      $region19: #{_lambda_.2} parent=15 // pred_region
        %p135 = scmp.lt.s32.totalorder %s9, 3
        %s136 = scalar_select %p135, %s9, 3
        %s137 = smul.addr %s136, 4
        %s138 = scalar_lea.vmem %s0, %s137
      $region20: #{_lambda_.2} parent=15 // pred_fallthru
        _
      // Predicated region
      $region21: #{_lambda_.2} parent=15 // pred_check
        %p139 = pneg %p55
      $region22: #{_lambda_.2} parent=15 // pred_check_branch
        %141 = sbr.rel (%p139) target = $region24
      $region23: #{_lambda_.2} parent=15 // pred_region
        %p142 = scmp.lt.s32.totalorder %s9, 3
        %s143 = scalar_select %p142, %s9, 3
        %s144 = smul.addr %s143, 2
        %s145 = scalar_lea.vmem %s1, %s144
      $region24: #{_lambda_.2} parent=15 // pred_fallthru
        _
      // Predicated region
      $region25: #{_lambda_.2} parent=15 // pred_check
        %p146 = pneg %p81
      $region26: #{_lambda_.2} parent=15 // pred_check_branch
        %148 = sbr.rel (%p146) target = $region28
      $region27: #{_lambda_.2} parent=15 // pred_region
        %p149 = scmp.lt.s32.totalorder %s9, 3
        %s150 = scalar_select %p149, %s9, 3
        %s151 = scalar_lea.vmem %s2, %s150
      $region28: #{_lambda_.2} parent=15 // pred_fallthru
        _
    $region16: #{_lambda_.2} parent=5 // pred_fallthru
      _
    %p152 = scmp.le.s32.totalorder 1, %s9
    %p153 = scmp.lt.s32.totalorder %s9, 5
    %p154 = pnand %p152, %p153
    %p155 = pneg %p154
    // Predicated region
    $region29: #{_lambda_.2} parent=5 // pred_check
      _
    $region30: #{_lambda_.2} parent=5 // pred_check_branch
      %157 = sbr.rel (%p154) target = $region32
    $region31: #{_lambda_.2} parent=5 // pred_region
      %s158 = ssub.s32 %s9, 1
      %p159 = scmp.lt.s32.totalorder %s14, 3
      %s160 = scalar_select %p159, %s14, 3
      %s161 = smul.addr %s160, 4
      %s162 = scalar_lea.vmem %s0, %s161
      %p163 = pneg %p35
      %p164 = pneg %p32
      %p165 = scmp.lt.s32.totalorder %s14, 3
      %s166 = scalar_select %p165, %s14, 3
      %s167 = smul.addr %s166, 2
      %s168 = scalar_lea.vmem %s1, %s167
      %p169 = pneg %p61
      %p170 = pneg %p58
      %p171 = scmp.lt.s32.totalorder %s14, 3
      %s172 = scalar_select %p171, %s14, 3
      %s173 = scalar_lea.vmem %s2, %s172
      %p174 = pneg %p87
      %p175 = pneg %p84
      %p176 = pneg %p113
      %p177 = pneg %p110
      %p178 = scmp.lt.s32.totalorder %s14, 3
      %s179 = scalar_select %p178, %s14, 3
      %s180 = smul.addr %s179, 8
      %s181 = scalar_lea.vmem %s3, %s180
      %p182 = scmp.lt.s32.totalorder %s14, 3
      %s183 = scalar_select %p182, %s14, 3
      %s184 = smul.addr %s183, 4
      %s185 = scalar_lea.vmem %s0, %s184
      %p186 = scmp.lt.s32.totalorder %s14, 3
      %s187 = scalar_select %p186, %s14, 3
      %s188 = smul.addr %s187, 2
      %s189 = scalar_lea.vmem %s1, %s188
      %p190 = scmp.lt.s32.totalorder %s14, 3
      %s191 = scalar_select %p190, %s14, 3
      %s192 = scalar_lea.vmem %s2, %s191
      %p193 = scmp.lt.s32.totalorder %s14, 3
      %s194 = scalar_select %p193, %s14, 3
      %s195 = smul.addr %s194, 8
      %s196 = scalar_lea.vmem %s3, %s195
      %v198 = vld [vmem:[%s185] sm:$0xf]
      %v199 = vld [vmem:[%s189] sm:$0x3]
      %v200 = vld [vmem:[%s192] sm:$0x1]
      %v202 = vlaneseq
      %v203 = vshrl.u32 %v202, 7
      %v204 = vsub.s32 0, %v203
      %v205 = vrot.slane %v200, %v204
      %vm207 = vcmask 31744
      %v209 = vsel %vm207, %v198, 0
      %vm211 = vcmask 1041408
      %v213 = vsel %vm211, %v199, 0
      %215 = vmatprep.subr.bf16.mxu0 0
      %216 = vmatpush1.bf16.msra.mxu0 0
      %217 = vmatprep.subr.bf16.mxu0 0
      %218 = vmatpush1.bf16.msra.mxu0 0
      %219 = vmatprep.subr.bf16.mxu0 0
      %220 = vmatpush1.bf16.msra.mxu0 0
      %221 = vmatprep.subr.bf16.mxu0 0
      %222 = vmatpush1.bf16.msra.mxu0 0
      %223 = vmatprep.subr.bf16.mxu0 0
      %224 = vmatpush1.bf16.msra.mxu0 0
      %225 = vmatprep.subr.bf16.mxu0 0
      %226 = vmatpush1.bf16.msra.mxu0 0
      %227 = vmatprep.subr.bf16.mxu0 0
      %228 = vmatpush1.bf16.msra.mxu0 0
      %229 = vmatprep.subr.bf16.mxu0 0
      %230 = vmatpush1.bf16.msra.mxu0 %v213
      %231 = vmatprep.subr.bf16.mxu0 0
      %232 = vmatpush2.bf16.msra.mxu0 0
      %233 = vmatprep.subr.bf16.mxu0 0
      %234 = vmatpush2.bf16.msra.mxu0 0
      %235 = vmatprep.subr.bf16.mxu0 0
      %236 = vmatpush2.bf16.msra.mxu0 0
      %237 = vmatprep.subr.bf16.mxu0 0
      %238 = vmatpush2.bf16.msra.mxu0 0
      %239 = vmatprep.subr.bf16.mxu0 0
      %240 = vmatpush2.bf16.msra.mxu0 0
      %241 = vmatprep.subr.bf16.mxu0 0
      %242 = vmatpush2.bf16.msra.mxu0 0
      %243 = vmatprep.subr.bf16.mxu0 0
      %244 = vmatpush2.bf16.msra.mxu0 0
      %245 = vmatprep.subr.bf16.mxu0 0
      %246 = vmatpush2.bf16.msra.mxu0 0
      %247 = vmatprep.mubr.bf16.mxu0 0
      %248 = vmatmul.mubr.bf16.gmra.mxu0 %v209
      %v249 = vpop.f32.mrf.mxu0
      %v250 = vadd.f32 %v205, %v249
      %v251 = vpop.f32.mrf.mxu0
      %v252 = vpop.f32.mrf.mxu0
      %v253 = vpop.f32.mrf.mxu0
      %254 = vdwg.mxu0
      %v255 = vmax.f32 %v250, 0.0
      %256 = vst [vmem:[%s196] sm:$0xff] %v255
      %p257 = scmp.lt.s32.totalorder %s14, 3
      %s258 = scalar_select %p257, %s14, 3
      %s259 = smul.addr %s258, 8
      %s260 = scalar_lea.vmem %s3, %s259
      // Predicated region
      $region33: #{_lambda_.2} parent=31 // pred_check
        %p261 = pneg %p110
      $region34: #{_lambda_.2} parent=31 // pred_check_branch
        %263 = sbr.rel (%p261) target = $region36
      $region35: #{_lambda_.2} parent=31 // pred_region
        _
      $region36: #{_lambda_.2} parent=31 // pred_fallthru
        _
    $region32: #{_lambda_.2} parent=5 // pred_fallthru
      _
    %p264 = scmp.le.s32.totalorder 2, %s9
    // Predicated region
    $region37: #{_lambda_.2} parent=5 // pred_check
      %p265 = pneg %p264
    $region38: #{_lambda_.2} parent=5 // pred_check_branch
      %267 = sbr.rel (%p265) target = $region40
    $region39: #{_lambda_.2} parent=5 // pred_region
      %s268 = ssub.s32 %s9, 2
      // Predicated region
      $region41: #{_lambda_.2} parent=39 // pred_check
        %p269 = pneg %p116
      $region42: #{_lambda_.2} parent=39 // pred_check_branch
        %271 = sbr.rel (%p269) target = $region44
      $region43: #{_lambda_.2} parent=39 // pred_region
        %p272 = scmp.lt.s32.totalorder %s15, 3
        %s273 = scalar_select %p272, %s15, 3
        %s274 = smul.addr %s273, 8
        %s275 = scalar_lea.vmem %s3, %s274
      $region44: #{_lambda_.2} parent=39 // pred_fallthru
        _
    $region40: #{_lambda_.2} parent=5 // pred_fallthru
      _
  $region6: #{_lambda_.2} parent=0 // loop_footer
    %s13 = sadd.s32 1, %s9
  $region7: #{_lambda_.2} parent=0 // loop_footer_branch
    %8 = sbr.rel target = $region3
  $region8: #{_lambda_.2} parent=0 // loop_exit
    _

// kernel: _lambda_.3
$region0: #{_lambda_.3}
  #allocation0 [shape = 'u32[]', space=smem, size = 0x4, offset = 0x4, fixed_abs, tag = 'smem constant byte address 0x4 - core index']
  #allocation1 [shape = 'u32[144,128]{1,0:T(1,128)}', space=vmem, size = 0x12000, scoped, tag = 'internal scratch']
  %s0 = inlined_call_operand.vmem [shape: bf16[2,18,24,128], index: 0, kind: input, shape index: {}]
  %s1 = inlined_call_operand.vmem [shape: bf16[1152,128], index: 1, kind: input, shape index: {}]
  %s2 = inlined_call_operand.vmem [shape: f32[1,128], index: 2, kind: input, shape index: {}]
  %s3 = inlined_call_operand.vmem [shape: f32[2,16,16,128], index: 3, kind: output, shape index: {}]
  %s4 = sld [smem:[#allocation0]]
  $region45: #{_lambda_.3} parent=0
    _
  %s6 = ssub.s32 1, %s4
  %s7 = scalar_select 0, %s6, %s4
  loop: start=0, step=1, limit=4
  $region2: #{_lambda_.3} parent=0 // loop_pre_header
    _
  $region3: #{_lambda_.3} parent=0 // loop_header
    %s9 = sphi 0, %s13
    %p10 = scmp.ge.s32.totalorder %s9, 4
    %s19 = sphi 0, %s21
    %s22 = sphi 0, %s19
    %s23 = sphi 0, %s22
    %s39 = sphi 0, %s23
    %s43 = sphi 0, %s43
    %s45 = sphi 0, %s43
    %s46 = sphi 0, %s45
    %s60 = sphi 0, %s46
    %s64 = sphi 0, %s64
    %s66 = sphi 0, %s64
    %s67 = sphi 0, %s66
    %s81 = sphi 0, %s67
    %s87 = sphi 0, %s89
    %s90 = sphi 0, %s87
    %s91 = sphi 0, %s90
    %s107 = sphi 0, %s91
  $region4: #{_lambda_.3} parent=0 // loop_header_branch
    %12 = sbr.rel (%p10) target = $region8
  $region5: #{_lambda_.3} parent=0 // loop_body
    %s14 = ssub.s32 %s9, 1
    %s15 = ssub.s32 %s9, 2
    %s16 = sadd.s32 %s9, 1
    %s17 = ssub.s32 %s9, %s16
    %p18 = scmp.eq.s32.totalorder %s17, 0
    %s20 = sadd.s32 %s19, 1
    %s21 = scalar_select %p18, %s19, %s20
    %p24 = pneg %p18
    %p25 = scmp.eq.s32.totalorder %s9, 1
    %p26 = por %p24, %p25
    %p27 = scmp.ne.s32.totalorder %s19, %s22
    %p28 = scmp.eq.s32.totalorder %s9, 0
    %p29 = por %p27, %p28
    %p30 = scmp.ne.s32.totalorder %s19, %s22
    %p31 = scmp.eq.s32.totalorder %s14, 1
    %p32 = por %p30, %p31
    %p33 = scmp.ne.s32.totalorder %s22, %s23
    %p34 = scmp.eq.s32.totalorder %s14, 0
    %p35 = por %p33, %p34
    %p36 = scmp.ne.s32.totalorder %s22, %s23
    %p37 = scmp.eq.s32.totalorder %s15, 1
    %p38 = por %p36, %p37
    %p40 = scmp.ne.s32.totalorder %s23, %s39
    %p41 = scmp.eq.s32.totalorder %s15, 0
    %p42 = por %p40, %p41
    %s44 = sadd.s32 %s43, 1
    %p47 = scmp.eq.s32.totalorder %s9, 1
    %p48 = scmp.ne.s32.totalorder %s43, %s45
    %p49 = scmp.eq.s32.totalorder %s9, 0
    %p50 = por %p48, %p49
    %p51 = scmp.ne.s32.totalorder %s43, %s45
    %p52 = scmp.eq.s32.totalorder %s14, 1
    %p53 = por %p51, %p52
    %p54 = scmp.ne.s32.totalorder %s45, %s46
    %p55 = scmp.eq.s32.totalorder %s14, 0
    %p56 = por %p54, %p55
    %p57 = scmp.ne.s32.totalorder %s45, %s46
    %p58 = scmp.eq.s32.totalorder %s15, 1
    %p59 = por %p57, %p58
    %p61 = scmp.ne.s32.totalorder %s46, %s60
    %p62 = scmp.eq.s32.totalorder %s15, 0
    %p63 = por %p61, %p62
    %s65 = sadd.s32 %s64, 1
    %p68 = scmp.eq.s32.totalorder %s9, 1
    %p69 = scmp.ne.s32.totalorder %s64, %s66
    %p70 = scmp.eq.s32.totalorder %s9, 0
    %p71 = por %p69, %p70
    %p72 = scmp.ne.s32.totalorder %s64, %s66
    %p73 = scmp.eq.s32.totalorder %s14, 1
    %p74 = por %p72, %p73
    %p75 = scmp.ne.s32.totalorder %s66, %s67
    %p76 = scmp.eq.s32.totalorder %s14, 0
    %p77 = por %p75, %p76
    %p78 = scmp.ne.s32.totalorder %s66, %s67
    %p79 = scmp.eq.s32.totalorder %s15, 1
    %p80 = por %p78, %p79
    %p82 = scmp.ne.s32.totalorder %s67, %s81
    %p83 = scmp.eq.s32.totalorder %s15, 0
    %p84 = por %p82, %p83
    %s85 = ssub.s32 %s9, %s16
    %p86 = scmp.eq.s32.totalorder %s85, 0
    %s88 = sadd.s32 %s87, 1
    %s89 = scalar_select %p86, %s87, %s88
    %p92 = pneg %p86
    %p93 = scmp.eq.s32.totalorder %s9, 1
    %p94 = por %p92, %p93
    %p95 = scmp.ne.s32.totalorder %s87, %s90
    %p96 = scmp.eq.s32.totalorder %s9, 0
    %p97 = por %p95, %p96
    %p98 = scmp.ne.s32.totalorder %s87, %s90
    %p99 = scmp.eq.s32.totalorder %s14, 1
    %p100 = por %p98, %p99
    %p101 = scmp.ne.s32.totalorder %s90, %s91
    %p102 = scmp.eq.s32.totalorder %s14, 0
    %p103 = por %p101, %p102
    %p104 = scmp.ne.s32.totalorder %s90, %s91
    %p105 = scmp.eq.s32.totalorder %s15, 1
    %p106 = por %p104, %p105
    %p108 = scmp.ne.s32.totalorder %s91, %s107
    %p109 = scmp.eq.s32.totalorder %s15, 0
    %p110 = por %p108, %p109
    %p111 = scmp.le.s32.totalorder 1, %s9
    %p112 = scmp.lt.s32.totalorder %s9, 3
    %p113 = pnand %p111, %p112
    %p114 = pneg %p113
    // Predicated region
    $region9: #{_lambda_.3} parent=5 // pred_check
      _
    $region10: #{_lambda_.3} parent=5 // pred_check_branch
      %116 = sbr.rel (%p113) target = $region12
    $region11: #{_lambda_.3} parent=5 // pred_region
      %s117 = ssub.s32 %s9, 1
      // Predicated region
      $region13: #{_lambda_.3} parent=11 // pred_check
        %p118 = pneg %p56
      $region14: #{_lambda_.3} parent=11 // pred_check_branch
        %120 = sbr.rel (%p118) target = $region16
      $region15: #{_lambda_.3} parent=11 // pred_region
        _
      $region16: #{_lambda_.3} parent=11 // pred_fallthru
        _
      // Predicated region
      $region17: #{_lambda_.3} parent=11 // pred_check
        %p121 = pneg %p77
      $region18: #{_lambda_.3} parent=11 // pred_check_branch
        %123 = sbr.rel (%p121) target = $region20
      $region19: #{_lambda_.3} parent=11 // pred_region
        _
      $region20: #{_lambda_.3} parent=11 // pred_fallthru
        _
    $region12: #{_lambda_.3} parent=5 // pred_fallthru
      _
    %p124 = scmp.lt.s32.totalorder %s9, 2
    // Predicated region
    $region21: #{_lambda_.3} parent=5 // pred_check
      %p125 = pneg %p124
    $region22: #{_lambda_.3} parent=5 // pred_check_branch
      %127 = sbr.rel (%p125) target = $region24
    $region23: #{_lambda_.3} parent=5 // pred_region
      // Predicated region
      $region25: #{_lambda_.3} parent=23 // pred_check
        %p128 = pneg %p29
      $region26: #{_lambda_.3} parent=23 // pred_check_branch
        %130 = sbr.rel (%p128) target = $region28
      $region27: #{_lambda_.3} parent=23 // pred_region
        %p131 = scmp.lt.s32.totalorder %s9, 1
        %s132 = scalar_select %p131, %s9, 1
        %s133 = smul.addr %s132, 54
        %s134 = smul.addr %s133, 4
        %s135 = scalar_lea.vmem %s0, %s134
      $region28: #{_lambda_.3} parent=23 // pred_fallthru
        _
    $region24: #{_lambda_.3} parent=5 // pred_fallthru
      _
    %p136 = scmp.le.s32.totalorder 1, %s9
    %p137 = scmp.lt.s32.totalorder %s9, 3
    %p138 = pnand %p136, %p137
    %p139 = pneg %p138
    // Predicated region
    $region29: #{_lambda_.3} parent=5 // pred_check
      _
    $region30: #{_lambda_.3} parent=5 // pred_check_branch
      %141 = sbr.rel (%p138) target = $region32
    $region31: #{_lambda_.3} parent=5 // pred_region
      %s142 = ssub.s32 %s9, 1
      %p143 = scmp.lt.s32.totalorder %s14, 1
      %s144 = scalar_select %p143, %s14, 1
      %s145 = smul.addr %s144, 54
      %s146 = smul.addr %s145, 4
      %s147 = scalar_lea.vmem %s0, %s146
      %p148 = pneg %p35
      %p149 = pneg %p32
      %p150 = pneg %p56
      %p151 = pneg %p53
      %p152 = pneg %p77
      %p153 = pneg %p74
      %p154 = pneg %p103
      %p155 = pneg %p100
      %p156 = scmp.lt.s32.totalorder %s14, 1
      %s157 = scalar_select %p156, %s14, 1
      %s158 = smul.addr %s157, 32
      %s159 = smul.addr %s158, 8
      %s160 = scalar_lea.vmem %s3, %s159
      %p161 = scmp.lt.s32.totalorder %s14, 1
      %s162 = scalar_select %p161, %s14, 1
      %s163 = smul.addr %s162, 54
      %s164 = smul.addr %s163, 4
      %s165 = scalar_lea.vmem %s0, %s164
      %p166 = scmp.lt.s32.totalorder %s14, 1
      %s167 = scalar_select %p166, %s14, 1
      %s168 = smul.addr %s167, 32
      %s169 = smul.addr %s168, 8
      %s170 = scalar_lea.vmem %s3, %s169
      %v172 = vld [vmem:[%s165] sm:$0xf]
      %v173 = vld [vmem:[%s165 + $0x4] sm:$0xf]
      %v174 = vld [vmem:[%s165 + $0x8] sm:$0xf]
      %v175 = vld [vmem:[%s165 + $0xc] sm:$0xf]
      %v176 = vld [vmem:[%s165 + $0x10] sm:$0xf]
      %v177 = vld [vmem:[%s165 + $0x14] sm:$0xf]
      %v178 = vld [vmem:[%s165 + $0x18] sm:$0xf]
      %v179 = vld [vmem:[%s165 + $0x1c] sm:$0xf]
      %v180 = vld [vmem:[%s165 + $0x20] sm:$0xf]
      %v181 = vld [vmem:[%s165 + $0x24] sm:$0xf]
      %v182 = vld [vmem:[%s165 + $0x28] sm:$0xf]
      %v183 = vld [vmem:[%s165 + $0x2c] sm:$0xf]
      %v184 = vld [vmem:[%s165 + $0x30] sm:$0xf]
      %v185 = vld [vmem:[%s165 + $0x34] sm:$0xf]
      %v186 = vld [vmem:[%s165 + $0x38] sm:$0xf]
      %v187 = vld [vmem:[%s165 + $0x3c] sm:$0xf]
      %v188 = vld [vmem:[%s165 + $0x40] sm:$0xf]
      %v189 = vld [vmem:[%s165 + $0x44] sm:$0xf]
      %v190 = vld [vmem:[%s165 + $0x48] sm:$0xf]
      %v191 = vld [vmem:[%s165 + $0x4c] sm:$0xf]
      %v192 = vld [vmem:[%s165 + $0x50] sm:$0xf]
      %v193 = vld [vmem:[%s165 + $0x54] sm:$0xf]
      %v194 = vld [vmem:[%s165 + $0x58] sm:$0xf]
      %v195 = vld [vmem:[%s165 + $0x5c] sm:$0xf]
      %v196 = vld [vmem:[%s165 + $0x60] sm:$0xf]
      %v197 = vld [vmem:[%s165 + $0x64] sm:$0xf]
      %v198 = vld [vmem:[%s165 + $0x68] sm:$0xf]
      %v199 = vld [vmem:[%s165 + $0x6c] sm:$0xf]
      %v200 = vld [vmem:[%s165 + $0x70] sm:$0xf]
      %v201 = vld [vmem:[%s165 + $0x74] sm:$0xf]
      %v202 = vld [vmem:[%s165 + $0x78] sm:$0xf]
      %v203 = vld [vmem:[%s165 + $0x7c] sm:$0xf]
      %v204 = vld [vmem:[%s165 + $0x80] sm:$0xf]
      %v205 = vld [vmem:[%s165 + $0x84] sm:$0xf]
      %v206 = vld [vmem:[%s165 + $0x88] sm:$0xf]
      %v207 = vld [vmem:[%s165 + $0x8c] sm:$0xf]
      %v208 = vld [vmem:[%s165 + $0x90] sm:$0xf]
      %v209 = vld [vmem:[%s165 + $0x94] sm:$0xf]
      %v210 = vld [vmem:[%s165 + $0x98] sm:$0xf]
      %v211 = vld [vmem:[%s165 + $0x9c] sm:$0xf]
      %v212 = vld [vmem:[%s165 + $0xa0] sm:$0xf]
      %v213 = vld [vmem:[%s165 + $0xa4] sm:$0xf]
      %v214 = vld [vmem:[%s165 + $0xa8] sm:$0xf]
      %v215 = vld [vmem:[%s165 + $0xac] sm:$0xf]
      %v216 = vld [vmem:[%s165 + $0xb0] sm:$0xf]
      %v217 = vld [vmem:[%s165 + $0xb4] sm:$0xf]
      %v218 = vld [vmem:[%s165 + $0xb8] sm:$0xf]
      %v219 = vld [vmem:[%s165 + $0xbc] sm:$0xf]
      %v220 = vld [vmem:[%s165 + $0xc0] sm:$0xf]
      %v221 = vld [vmem:[%s165 + $0xc4] sm:$0xf]
      %v222 = vld [vmem:[%s165 + $0xc8] sm:$0xf]
      %v223 = vld [vmem:[%s165 + $0xcc] sm:$0xf]
      %v224 = vld [vmem:[%s165 + $0xd0] sm:$0xf]
      %v225 = vld [vmem:[%s165 + $0xd4] sm:$0xf]
      %vm226 = vsmask.f32 3328
      %vm227 = vsmask.f32 7440
      %vm228 = vmor %vm226, %vm227
      %v230 = vshrl.u32 %v172, 16
      %v232 = vrot.slane %v230, 4
      %v233 = vshll.u32 %v172, 16
      %v235 = vrot.slane %v233, 5
      %v236 = vor.u32 %v232, %v235
      %v237 = vrot.slane %v236, 4
      %v239 = vshll.u32 %v173, 16
      %v241 = vrot.slane %v239, 5
      %v242 = vsel %vm228, %v237, %v241
      %v243 = vshrl.u32 %v173, 16
      %v245 = vrot.slane %v243, 4
      %v246 = vor.u32 %v245, %v241
      %v247 = vrot.slane %v246, 4
      %v249 = vshll.u32 %v174, 16
      %v251 = vrot.slane %v249, 5
      %v252 = vsel %vm228, %v247, %v251
      %v254 = vshrl.u32 %v175, 16
      %v256 = vrot.slane %v254, 4
      %v257 = vshll.u32 %v175, 16
      %v259 = vrot.slane %v257, 5
      %v260 = vor.u32 %v256, %v259
      %v261 = vrot.slane %v260, 4
      %v263 = vshll.u32 %v176, 16
      %v265 = vrot.slane %v263, 5
      %v266 = vsel %vm228, %v261, %v265
      %v267 = vshrl.u32 %v176, 16
      %v269 = vrot.slane %v267, 4
      %v270 = vor.u32 %v269, %v265
      %v271 = vrot.slane %v270, 4
      %v273 = vshll.u32 %v177, 16
      %v275 = vrot.slane %v273, 5
      %v276 = vsel %vm228, %v271, %v275
      %v278 = vshrl.u32 %v178, 16
      %v280 = vrot.slane %v278, 4
      %v281 = vshll.u32 %v178, 16
      %v283 = vrot.slane %v281, 5
      %v284 = vor.u32 %v280, %v283
      %v285 = vrot.slane %v284, 4
      %v287 = vshll.u32 %v179, 16
      %v289 = vrot.slane %v287, 5
      %v290 = vsel %vm228, %v285, %v289
      %v291 = vshrl.u32 %v179, 16
      %v293 = vrot.slane %v291, 4
      %v294 = vor.u32 %v293, %v289
      %v295 = vrot.slane %v294, 4
      %v297 = vshll.u32 %v180, 16
      %v299 = vrot.slane %v297, 5
      %v300 = vsel %vm228, %v295, %v299
      %v302 = vshrl.u32 %v181, 16
      %v304 = vrot.slane %v302, 4
      %v305 = vshll.u32 %v181, 16
      %v307 = vrot.slane %v305, 5
      %v308 = vor.u32 %v304, %v307
      %v309 = vrot.slane %v308, 4
      %v311 = vshll.u32 %v182, 16
      %v313 = vrot.slane %v311, 5
      %v314 = vsel %vm228, %v309, %v313
      %v315 = vshrl.u32 %v182, 16
      %v317 = vrot.slane %v315, 4
      %v318 = vor.u32 %v317, %v313
      %v319 = vrot.slane %v318, 4
      %v321 = vshll.u32 %v183, 16
      %v323 = vrot.slane %v321, 5
      %v324 = vsel %vm228, %v319, %v323
      %v326 = vshrl.u32 %v184, 16
      %v328 = vrot.slane %v326, 4
      %v329 = vshll.u32 %v184, 16
      %v331 = vrot.slane %v329, 5
      %v332 = vor.u32 %v328, %v331
      %v333 = vrot.slane %v332, 4
      %v335 = vshll.u32 %v185, 16
      %v337 = vrot.slane %v335, 5
      %v338 = vsel %vm228, %v333, %v337
      %v339 = vshrl.u32 %v185, 16
      %v341 = vrot.slane %v339, 4
      %v342 = vor.u32 %v341, %v337
      %v343 = vrot.slane %v342, 4
      %v345 = vshll.u32 %v186, 16
      %v347 = vrot.slane %v345, 5
      %v348 = vsel %vm228, %v343, %v347
      %v350 = vshrl.u32 %v187, 16
      %v352 = vrot.slane %v350, 4
      %v353 = vshll.u32 %v187, 16
      %v355 = vrot.slane %v353, 5
      %v356 = vor.u32 %v352, %v355
      %v357 = vrot.slane %v356, 4
      %v359 = vshll.u32 %v188, 16
      %v361 = vrot.slane %v359, 5
      %v362 = vsel %vm228, %v357, %v361
      %v363 = vshrl.u32 %v188, 16
      %v365 = vrot.slane %v363, 4
      %v366 = vor.u32 %v365, %v361
      %v367 = vrot.slane %v366, 4
      %v369 = vshll.u32 %v189, 16
      %v371 = vrot.slane %v369, 5
      %v372 = vsel %vm228, %v367, %v371
      %v374 = vshrl.u32 %v190, 16
      %v376 = vrot.slane %v374, 4
      %v377 = vshll.u32 %v190, 16
      %v379 = vrot.slane %v377, 5
      %v380 = vor.u32 %v376, %v379
      %v381 = vrot.slane %v380, 4
      %v383 = vshll.u32 %v191, 16
      %v385 = vrot.slane %v383, 5
      %v386 = vsel %vm228, %v381, %v385
      %v387 = vshrl.u32 %v191, 16
      %v389 = vrot.slane %v387, 4
      %v390 = vor.u32 %v389, %v385
      %v391 = vrot.slane %v390, 4
      %v393 = vshll.u32 %v192, 16
      %v395 = vrot.slane %v393, 5
      %v396 = vsel %vm228, %v391, %v395
      %v398 = vshrl.u32 %v193, 16
      %v400 = vrot.slane %v398, 4
      %v401 = vshll.u32 %v193, 16
      %v403 = vrot.slane %v401, 5
      %v404 = vor.u32 %v400, %v403
      %v405 = vrot.slane %v404, 4
      %v407 = vshll.u32 %v194, 16
      %v409 = vrot.slane %v407, 5
      %v410 = vsel %vm228, %v405, %v409
      %v411 = vshrl.u32 %v194, 16
      %v413 = vrot.slane %v411, 4
      %v414 = vor.u32 %v413, %v409
      %v415 = vrot.slane %v414, 4
      %v417 = vshll.u32 %v195, 16
      %v419 = vrot.slane %v417, 5
      %v420 = vsel %vm228, %v415, %v419
      %v422 = vshrl.u32 %v196, 16
      %v424 = vrot.slane %v422, 4
      %v425 = vshll.u32 %v196, 16
      %v427 = vrot.slane %v425, 5
      %v428 = vor.u32 %v424, %v427
      %v429 = vrot.slane %v428, 4
      %v431 = vshll.u32 %v197, 16
      %v433 = vrot.slane %v431, 5
      %v434 = vsel %vm228, %v429, %v433
      %v435 = vshrl.u32 %v197, 16
      %v437 = vrot.slane %v435, 4
      %v438 = vor.u32 %v437, %v433
      %v439 = vrot.slane %v438, 4
      %v441 = vshll.u32 %v198, 16
      %v443 = vrot.slane %v441, 5
      %v444 = vsel %vm228, %v439, %v443
      %v446 = vshrl.u32 %v199, 16
      %v448 = vrot.slane %v446, 4
      %v449 = vshll.u32 %v199, 16
      %v451 = vrot.slane %v449, 5
      %v452 = vor.u32 %v448, %v451
      %v453 = vrot.slane %v452, 4
      %v455 = vshll.u32 %v200, 16
      %v457 = vrot.slane %v455, 5
      %v458 = vsel %vm228, %v453, %v457
      %v459 = vshrl.u32 %v200, 16
      %v461 = vrot.slane %v459, 4
      %v462 = vor.u32 %v461, %v457
      %v463 = vrot.slane %v462, 4
      %v465 = vshll.u32 %v201, 16
      %v467 = vrot.slane %v465, 5
      %v468 = vsel %vm228, %v463, %v467
      %v470 = vshrl.u32 %v202, 16
      %v472 = vrot.slane %v470, 4
      %v473 = vshll.u32 %v202, 16
      %v475 = vrot.slane %v473, 5
      %v476 = vor.u32 %v472, %v475
      %v477 = vrot.slane %v476, 4
      %v479 = vshll.u32 %v203, 16
      %v481 = vrot.slane %v479, 5
      %v482 = vsel %vm228, %v477, %v481
      %v483 = vshrl.u32 %v203, 16
      %v485 = vrot.slane %v483, 4
      %v486 = vor.u32 %v485, %v481
      %v487 = vrot.slane %v486, 4
      %v489 = vshll.u32 %v204, 16
      %v491 = vrot.slane %v489, 5
      %v492 = vsel %vm228, %v487, %v491
      %v494 = vshrl.u32 %v205, 16
      %v496 = vrot.slane %v494, 4
      %v497 = vshll.u32 %v205, 16
      %v499 = vrot.slane %v497, 5
      %v500 = vor.u32 %v496, %v499
      %v501 = vrot.slane %v500, 4
      %v503 = vshll.u32 %v206, 16
      %v505 = vrot.slane %v503, 5
      %v506 = vsel %vm228, %v501, %v505
      %v507 = vshrl.u32 %v206, 16
      %v509 = vrot.slane %v507, 4
      %v510 = vor.u32 %v509, %v505
      %v511 = vrot.slane %v510, 4
      %v513 = vshll.u32 %v207, 16
      %v515 = vrot.slane %v513, 5
      %v516 = vsel %vm228, %v511, %v515
      %v518 = vshrl.u32 %v208, 16
      %v520 = vrot.slane %v518, 4
      %v521 = vshll.u32 %v208, 16
      %v523 = vrot.slane %v521, 5
      %v524 = vor.u32 %v520, %v523
      %v525 = vrot.slane %v524, 4
      %v527 = vshll.u32 %v209, 16
      %v529 = vrot.slane %v527, 5
      %v530 = vsel %vm228, %v525, %v529
      %v531 = vshrl.u32 %v209, 16
      %v533 = vrot.slane %v531, 4
      %v534 = vor.u32 %v533, %v529
      %v535 = vrot.slane %v534, 4
      %v537 = vshll.u32 %v210, 16
      %v539 = vrot.slane %v537, 5
      %v540 = vsel %vm228, %v535, %v539
      %v542 = vshrl.u32 %v211, 16
      %v544 = vrot.slane %v542, 4
      %v545 = vshll.u32 %v211, 16
      %v547 = vrot.slane %v545, 5
      %v548 = vor.u32 %v544, %v547
      %v549 = vrot.slane %v548, 4
      %v551 = vshll.u32 %v212, 16
      %v553 = vrot.slane %v551, 5
      %v554 = vsel %vm228, %v549, %v553
      %v555 = vshrl.u32 %v212, 16
      %v557 = vrot.slane %v555, 4
      %v558 = vor.u32 %v557, %v553
      %v559 = vrot.slane %v558, 4
      %v561 = vshll.u32 %v213, 16
      %v563 = vrot.slane %v561, 5
      %v564 = vsel %vm228, %v559, %v563
      %v566 = vshrl.u32 %v214, 16
      %v568 = vrot.slane %v566, 4
      %v569 = vshll.u32 %v214, 16
      %v571 = vrot.slane %v569, 5
      %v572 = vor.u32 %v568, %v571
      %v573 = vrot.slane %v572, 4
      %v575 = vshll.u32 %v215, 16
      %v577 = vrot.slane %v575, 5
      %v578 = vsel %vm228, %v573, %v577
      %v579 = vshrl.u32 %v215, 16
      %v581 = vrot.slane %v579, 4
      %v582 = vor.u32 %v581, %v577
      %v583 = vrot.slane %v582, 4
      %v585 = vshll.u32 %v216, 16
      %v587 = vrot.slane %v585, 5
      %v588 = vsel %vm228, %v583, %v587
      %v590 = vshrl.u32 %v217, 16
      %v592 = vrot.slane %v590, 4
      %v593 = vshll.u32 %v217, 16
      %v595 = vrot.slane %v593, 5
      %v596 = vor.u32 %v592, %v595
      %v597 = vrot.slane %v596, 4
      %v599 = vshll.u32 %v218, 16
      %v601 = vrot.slane %v599, 5
      %v602 = vsel %vm228, %v597, %v601
      %v603 = vshrl.u32 %v218, 16
      %v605 = vrot.slane %v603, 4
      %v606 = vor.u32 %v605, %v601
      %v607 = vrot.slane %v606, 4
      %v609 = vshll.u32 %v219, 16
      %v611 = vrot.slane %v609, 5
      %v612 = vsel %vm228, %v607, %v611
      %vm661 = vcmask 1042432
      %vm662 = vcmask 1046532
      %vm663 = vmor %vm661, %vm662
      %v664 = vrot.slane %v172, 5
      %v665 = vrot.slane %v664, 4
      %v666 = vrot.slane %v173, 5
      %v667 = vsel %vm663, %v665, %v666
      %v668 = vrot.slane %v666, 4
      %v669 = vrot.slane %v174, 5
      %v670 = vsel %vm663, %v668, %v669
      %v671 = vrot.slane %v175, 5
      %v672 = vrot.slane %v671, 4
      %v673 = vrot.slane %v176, 5
      %v674 = vsel %vm663, %v672, %v673
      %v675 = vrot.slane %v673, 4
      %v676 = vrot.slane %v177, 5
      %v677 = vsel %vm663, %v675, %v676
      %v678 = vrot.slane %v178, 5
      %v679 = vrot.slane %v678, 4
      %v680 = vrot.slane %v179, 5
      %v681 = vsel %vm663, %v679, %v680
      %v682 = vrot.slane %v680, 4
      %v683 = vrot.slane %v180, 5
      %v684 = vsel %vm663, %v682, %v683
      %v685 = vrot.slane %v181, 5
      %v686 = vrot.slane %v685, 4
      %v687 = vrot.slane %v182, 5
      %v688 = vsel %vm663, %v686, %v687
      %v689 = vrot.slane %v687, 4
      %v690 = vrot.slane %v183, 5
      %v691 = vsel %vm663, %v689, %v690
      %v692 = vrot.slane %v184, 5
      %v693 = vrot.slane %v692, 4
      %v694 = vrot.slane %v185, 5
      %v695 = vsel %vm663, %v693, %v694
      %v696 = vrot.slane %v694, 4
      %v697 = vrot.slane %v186, 5
      %v698 = vsel %vm663, %v696, %v697
      %v699 = vrot.slane %v187, 5
      %v700 = vrot.slane %v699, 4
      %v701 = vrot.slane %v188, 5
      %v702 = vsel %vm663, %v700, %v701
      %v703 = vrot.slane %v701, 4
      %v704 = vrot.slane %v189, 5
      %v705 = vsel %vm663, %v703, %v704
      %v706 = vrot.slane %v190, 5
      %v707 = vrot.slane %v706, 4
      %v708 = vrot.slane %v191, 5
      %v709 = vsel %vm663, %v707, %v708
      %v710 = vrot.slane %v708, 4
      %v711 = vrot.slane %v192, 5
      %v712 = vsel %vm663, %v710, %v711
      %v713 = vrot.slane %v193, 5
      %v714 = vrot.slane %v713, 4
      %v715 = vrot.slane %v194, 5
      %v716 = vsel %vm663, %v714, %v715
      %v717 = vrot.slane %v715, 4
      %v718 = vrot.slane %v195, 5
      %v719 = vsel %vm663, %v717, %v718
      %v720 = vrot.slane %v196, 5
      %v721 = vrot.slane %v720, 4
      %v722 = vrot.slane %v197, 5
      %v723 = vsel %vm663, %v721, %v722
      %v724 = vrot.slane %v722, 4
      %v725 = vrot.slane %v198, 5
      %v726 = vsel %vm663, %v724, %v725
      %v727 = vrot.slane %v199, 5
      %v728 = vrot.slane %v727, 4
      %v729 = vrot.slane %v200, 5
      %v730 = vsel %vm663, %v728, %v729
      %v731 = vrot.slane %v729, 4
      %v732 = vrot.slane %v201, 5
      %v733 = vsel %vm663, %v731, %v732
      %v734 = vrot.slane %v202, 5
      %v735 = vrot.slane %v734, 4
      %v736 = vrot.slane %v203, 5
      %v737 = vsel %vm663, %v735, %v736
      %v738 = vrot.slane %v736, 4
      %v739 = vrot.slane %v204, 5
      %v740 = vsel %vm663, %v738, %v739
      %v741 = vrot.slane %v205, 5
      %v742 = vrot.slane %v741, 4
      %v743 = vrot.slane %v206, 5
      %v744 = vsel %vm663, %v742, %v743
      %v745 = vrot.slane %v743, 4
      %v746 = vrot.slane %v207, 5
      %v747 = vsel %vm663, %v745, %v746
      %v748 = vrot.slane %v208, 5
      %v749 = vrot.slane %v748, 4
      %v750 = vrot.slane %v209, 5
      %v751 = vsel %vm663, %v749, %v750
      %v752 = vrot.slane %v750, 4
      %v753 = vrot.slane %v210, 5
      %v754 = vsel %vm663, %v752, %v753
      %v755 = vrot.slane %v211, 5
      %v756 = vrot.slane %v755, 4
      %v757 = vrot.slane %v212, 5
      %v758 = vsel %vm663, %v756, %v757
      %v759 = vrot.slane %v757, 4
      %v760 = vrot.slane %v213, 5
      %v761 = vsel %vm663, %v759, %v760
      %v762 = vrot.slane %v214, 5
      %v763 = vrot.slane %v762, 4
      %v764 = vrot.slane %v215, 5
      %v765 = vsel %vm663, %v763, %v764
      %v766 = vrot.slane %v764, 4
      %v767 = vrot.slane %v216, 5
      %v768 = vsel %vm663, %v766, %v767
      %v769 = vrot.slane %v217, 5
      %v770 = vrot.slane %v769, 4
      %v771 = vrot.slane %v218, 5
      %v772 = vsel %vm663, %v770, %v771
      %v773 = vrot.slane %v771, 4
      %v774 = vrot.slane %v219, 5
      %v775 = vsel %vm663, %v773, %v774
      %v777 = vshrl.u32 %v220, 16
      %v779 = vrot.slane %v777, 4
      %v780 = vshll.u32 %v220, 16
      %v782 = vrot.slane %v780, 5
      %v783 = vor.u32 %v779, %v782
      %v784 = vrot.slane %v783, 4
      %v786 = vshll.u32 %v221, 16
      %v788 = vrot.slane %v786, 5
      %v789 = vsel %vm228, %v784, %v788
      %v790 = vshrl.u32 %v221, 16
      %v792 = vrot.slane %v790, 4
      %v793 = vor.u32 %v792, %v788
      %v794 = vrot.slane %v793, 4
      %v796 = vshll.u32 %v222, 16
      %v798 = vrot.slane %v796, 5
      %v799 = vsel %vm228, %v794, %v798
      %v803 = vrot.slane %v220, 5
      %v804 = vrot.slane %v803, 4
      %v805 = vrot.slane %v221, 5
      %v806 = vsel %vm663, %v804, %v805
      %v807 = vrot.slane %v805, 4
      %v808 = vrot.slane %v222, 5
      %v809 = vsel %vm663, %v807, %v808
      %v811 = vshrl.u32 %v223, 16
      %v813 = vrot.slane %v811, 4
      %v814 = vshll.u32 %v223, 16
      %v816 = vrot.slane %v814, 5
      %v817 = vor.u32 %v813, %v816
      %v818 = vrot.slane %v817, 4
      %v820 = vshll.u32 %v224, 16
      %v822 = vrot.slane %v820, 5
      %v823 = vsel %vm228, %v818, %v822
      %v824 = vshrl.u32 %v224, 16
      %v826 = vrot.slane %v824, 4
      %v827 = vor.u32 %v826, %v822
      %v828 = vrot.slane %v827, 4
      %v830 = vshll.u32 %v225, 16
      %v832 = vrot.slane %v830, 5
      %v833 = vsel %vm228, %v828, %v832
      %v837 = vrot.slane %v223, 5
      %v838 = vrot.slane %v837, 4
      %v839 = vrot.slane %v224, 5
      %v840 = vsel %vm663, %v838, %v839
      %v841 = vrot.slane %v839, 4
      %v842 = vrot.slane %v225, 5
      %v843 = vsel %vm663, %v841, %v842
      %v844 = vunpack.c.l.b16 %v172
      %v845 = vunpack.c.l.b16 %v173
      %v846 = vunpack.c.l.b16 %v175
      %v847 = vunpack.c.l.b16 %v176
      %v848 = vunpack.c.l.b16 %v178
      %v849 = vunpack.c.l.b16 %v179
      %v850 = vunpack.c.l.b16 %v181
      %v851 = vunpack.c.l.b16 %v182
      %v852 = vunpack.c.l.b16 %v184
      %v853 = vunpack.c.l.b16 %v185
      %v854 = vunpack.c.l.b16 %v187
      %v855 = vunpack.c.l.b16 %v188
      %v856 = vunpack.c.l.b16 %v190
      %v857 = vunpack.c.l.b16 %v191
      %v858 = vunpack.c.l.b16 %v193
      %v859 = vunpack.c.l.b16 %v194
      %v860 = vunpack.c.l.b16 %v196
      %v861 = vunpack.c.l.b16 %v197
      %v862 = vunpack.c.l.b16 %v199
      %v863 = vunpack.c.l.b16 %v200
      %v864 = vunpack.c.l.b16 %v202
      %v865 = vunpack.c.l.b16 %v203
      %v866 = vunpack.c.l.b16 %v205
      %v867 = vunpack.c.l.b16 %v206
      %v868 = vunpack.c.l.b16 %v208
      %v869 = vunpack.c.l.b16 %v209
      %v870 = vunpack.c.l.b16 %v211
      %v871 = vunpack.c.l.b16 %v212
      %v872 = vunpack.c.l.b16 %v214
      %v873 = vunpack.c.l.b16 %v215
      %v874 = vunpack.c.l.b16 %v217
      %v875 = vunpack.c.l.b16 %v218
      %v876 = vpack.c.b16 %v845, %v844
      %v877 = vpack.c.b16 %v847, %v846
      %v878 = vpack.c.b16 %v849, %v848
      %v879 = vpack.c.b16 %v851, %v850
      %v880 = vpack.c.b16 %v853, %v852
      %v881 = vpack.c.b16 %v855, %v854
      %v882 = vpack.c.b16 %v857, %v856
      %v883 = vpack.c.b16 %v859, %v858
      %v884 = vpack.c.b16 %v861, %v860
      %v885 = vpack.c.b16 %v863, %v862
      %v886 = vpack.c.b16 %v865, %v864
      %v887 = vpack.c.b16 %v867, %v866
      %v888 = vpack.c.b16 %v869, %v868
      %v889 = vpack.c.b16 %v871, %v870
      %v890 = vpack.c.b16 %v873, %v872
      %v891 = vpack.c.b16 %v875, %v874
      %v908 = vunpack.c.l.b16 %v242
      %v909 = vunpack.c.l.b16 %v252
      %v910 = vunpack.c.l.b16 %v266
      %v911 = vunpack.c.l.b16 %v276
      %v912 = vunpack.c.l.b16 %v290
      %v913 = vunpack.c.l.b16 %v300
      %v914 = vunpack.c.l.b16 %v314
      %v915 = vunpack.c.l.b16 %v324
      %v916 = vunpack.c.l.b16 %v338
      %v917 = vunpack.c.l.b16 %v348
      %v918 = vunpack.c.l.b16 %v362
      %v919 = vunpack.c.l.b16 %v372
      %v920 = vunpack.c.l.b16 %v386
      %v921 = vunpack.c.l.b16 %v396
      %v922 = vunpack.c.l.b16 %v410
      %v923 = vunpack.c.l.b16 %v420
      %v924 = vunpack.c.l.b16 %v434
      %v925 = vunpack.c.l.b16 %v444
      %v926 = vunpack.c.l.b16 %v458
      %v927 = vunpack.c.l.b16 %v468
      %v928 = vunpack.c.l.b16 %v482
      %v929 = vunpack.c.l.b16 %v492
      %v930 = vunpack.c.l.b16 %v506
      %v931 = vunpack.c.l.b16 %v516
      %v932 = vunpack.c.l.b16 %v530
      %v933 = vunpack.c.l.b16 %v540
      %v934 = vunpack.c.l.b16 %v554
      %v935 = vunpack.c.l.b16 %v564
      %v936 = vunpack.c.l.b16 %v578
      %v937 = vunpack.c.l.b16 %v588
      %v938 = vunpack.c.l.b16 %v602
      %v939 = vunpack.c.l.b16 %v612
      %v940 = vpack.c.b16 %v909, %v908
      %v941 = vpack.c.b16 %v911, %v910
      %v942 = vpack.c.b16 %v913, %v912
      %v943 = vpack.c.b16 %v915, %v914
      %v944 = vpack.c.b16 %v917, %v916
      %v945 = vpack.c.b16 %v919, %v918
      %v946 = vpack.c.b16 %v921, %v920
      %v947 = vpack.c.b16 %v923, %v922
      %v948 = vpack.c.b16 %v925, %v924
      %v949 = vpack.c.b16 %v927, %v926
      %v950 = vpack.c.b16 %v929, %v928
      %v951 = vpack.c.b16 %v931, %v930
      %v952 = vpack.c.b16 %v933, %v932
      %v953 = vpack.c.b16 %v935, %v934
      %v954 = vpack.c.b16 %v937, %v936
      %v955 = vpack.c.b16 %v939, %v938
      %v972 = vunpack.c.l.b16 %v667
      %v973 = vunpack.c.l.b16 %v670
      %v974 = vunpack.c.l.b16 %v674
      %v975 = vunpack.c.l.b16 %v677
      %v976 = vunpack.c.l.b16 %v681
      %v977 = vunpack.c.l.b16 %v684
      %v978 = vunpack.c.l.b16 %v688
      %v979 = vunpack.c.l.b16 %v691
      %v980 = vunpack.c.l.b16 %v695
      %v981 = vunpack.c.l.b16 %v698
      %v982 = vunpack.c.l.b16 %v702
      %v983 = vunpack.c.l.b16 %v705
      %v984 = vunpack.c.l.b16 %v709
      %v985 = vunpack.c.l.b16 %v712
      %v986 = vunpack.c.l.b16 %v716
      %v987 = vunpack.c.l.b16 %v719
      %v988 = vunpack.c.l.b16 %v723
      %v989 = vunpack.c.l.b16 %v726
      %v990 = vunpack.c.l.b16 %v730
      %v991 = vunpack.c.l.b16 %v733
      %v992 = vunpack.c.l.b16 %v737
      %v993 = vunpack.c.l.b16 %v740
      %v994 = vunpack.c.l.b16 %v744
      %v995 = vunpack.c.l.b16 %v747
      %v996 = vunpack.c.l.b16 %v751
      %v997 = vunpack.c.l.b16 %v754
      %v998 = vunpack.c.l.b16 %v758
      %v999 = vunpack.c.l.b16 %v761
      %v1000 = vunpack.c.l.b16 %v765
      %v1001 = vunpack.c.l.b16 %v768
      %v1002 = vunpack.c.l.b16 %v772
      %v1003 = vunpack.c.l.b16 %v775
      %v1004 = vpack.c.b16 %v973, %v972
      %v1005 = vpack.c.b16 %v975, %v974
      %v1006 = vpack.c.b16 %v977, %v976
      %v1007 = vpack.c.b16 %v979, %v978
      %v1008 = vpack.c.b16 %v981, %v980
      %v1009 = vpack.c.b16 %v983, %v982
      %v1010 = vpack.c.b16 %v985, %v984
      %v1011 = vpack.c.b16 %v987, %v986
      %v1012 = vpack.c.b16 %v989, %v988
      %v1013 = vpack.c.b16 %v991, %v990
      %v1014 = vpack.c.b16 %v993, %v992
      %v1015 = vpack.c.b16 %v995, %v994
      %v1016 = vpack.c.b16 %v997, %v996
      %v1017 = vpack.c.b16 %v999, %v998
      %v1018 = vpack.c.b16 %v1001, %v1000
      %v1019 = vpack.c.b16 %v1003, %v1002
      %v1036 = vunpack.c.l.b16 %v220
      %v1037 = vunpack.c.l.b16 %v221
      %v1038 = vpack.c.b16 %v1037, %v1036
      %v1040 = vunpack.c.l.b16 %v789
      %v1041 = vunpack.c.l.b16 %v799
      %v1042 = vpack.c.b16 %v1041, %v1040
      %v1044 = vunpack.c.l.b16 %v806
      %v1045 = vunpack.c.l.b16 %v809
      %v1046 = vpack.c.b16 %v1045, %v1044
      %v1048 = vunpack.c.l.b16 %v223
      %v1049 = vunpack.c.l.b16 %v224
      %v1050 = vpack.c.b16 %v1049, %v1048
      %v1052 = vunpack.c.l.b16 %v823
      %v1053 = vunpack.c.l.b16 %v833
      %v1054 = vpack.c.b16 %v1053, %v1052
      %v1056 = vunpack.c.l.b16 %v840
      %v1057 = vunpack.c.l.b16 %v843
      %v1058 = vpack.c.b16 %v1057, %v1056
      %v1060 = vld [vmem:[%s1] sm:$0xf]
      %v1061 = vld [vmem:[%s1 + $0x4] sm:$0xf]
      %v1062 = vld [vmem:[%s1 + $0x8] sm:$0xf]
      %v1063 = vld [vmem:[%s1 + $0xc] sm:$0xf]
      %v1064 = vld [vmem:[%s1 + $0x10] sm:$0xf]
      %v1065 = vld [vmem:[%s1 + $0x14] sm:$0xf]
      %v1066 = vld [vmem:[%s1 + $0x18] sm:$0xf]
      %v1067 = vld [vmem:[%s1 + $0x1c] sm:$0xf]
      %v1068 = vld [vmem:[%s1 + $0x20] sm:$0xf]
      %v1069 = vld [vmem:[%s1 + $0x24] sm:$0xf]
      %v1070 = vld [vmem:[%s1 + $0x28] sm:$0xf]
      %v1071 = vld [vmem:[%s1 + $0x2c] sm:$0xf]
      %v1072 = vld [vmem:[%s1 + $0x30] sm:$0xf]
      %v1073 = vld [vmem:[%s1 + $0x34] sm:$0xf]
      %v1074 = vld [vmem:[%s1 + $0x38] sm:$0xf]
      %v1075 = vld [vmem:[%s1 + $0x3c] sm:$0xf]
      %v1076 = vld [vmem:[%s1 + $0x40] sm:$0xf]
      %v1077 = vld [vmem:[%s1 + $0x44] sm:$0xf]
      %v1078 = vld [vmem:[%s1 + $0x48] sm:$0xf]
      %v1079 = vld [vmem:[%s1 + $0x4c] sm:$0xf]
      %v1080 = vld [vmem:[%s1 + $0x50] sm:$0xf]
      %v1081 = vld [vmem:[%s1 + $0x54] sm:$0xf]
      %v1082 = vld [vmem:[%s1 + $0x58] sm:$0xf]
      %v1083 = vld [vmem:[%s1 + $0x5c] sm:$0xf]
      %v1084 = vld [vmem:[%s1 + $0x60] sm:$0xf]
      %v1085 = vld [vmem:[%s1 + $0x64] sm:$0xf]
      %v1086 = vld [vmem:[%s1 + $0x68] sm:$0xf]
      %v1087 = vld [vmem:[%s1 + $0x6c] sm:$0xf]
      %v1088 = vld [vmem:[%s1 + $0x70] sm:$0xf]
      %v1089 = vld [vmem:[%s1 + $0x74] sm:$0xf]
      %v1090 = vld [vmem:[%s1 + $0x78] sm:$0xf]
      %v1091 = vld [vmem:[%s1 + $0x7c] sm:$0xf]
      %v1092 = vld [vmem:[%s1 + $0x80] sm:$0xf]
      %v1093 = vld [vmem:[%s1 + $0x84] sm:$0xf]
      %v1094 = vld [vmem:[%s1 + $0x88] sm:$0xf]
      %v1095 = vld [vmem:[%s1 + $0x8c] sm:$0xf]
      %v1096 = vld [vmem:[%s1 + $0x90] sm:$0xf]
      %v1097 = vld [vmem:[%s1 + $0x94] sm:$0xf]
      %v1098 = vld [vmem:[%s1 + $0x98] sm:$0xf]
      %v1099 = vld [vmem:[%s1 + $0x9c] sm:$0xf]
      %v1100 = vld [vmem:[%s1 + $0xa0] sm:$0xf]
      %v1101 = vld [vmem:[%s1 + $0xa4] sm:$0xf]
      %v1102 = vld [vmem:[%s1 + $0xa8] sm:$0xf]
      %v1103 = vld [vmem:[%s1 + $0xac] sm:$0xf]
      %v1104 = vld [vmem:[%s1 + $0xb0] sm:$0xf]
      %v1105 = vld [vmem:[%s1 + $0xb4] sm:$0xf]
      %v1106 = vld [vmem:[%s1 + $0xb8] sm:$0xf]
      %v1107 = vld [vmem:[%s1 + $0xbc] sm:$0xf]
      %v1108 = vld [vmem:[%s1 + $0xc0] sm:$0xf]
      %v1109 = vld [vmem:[%s1 + $0xc4] sm:$0xf]
      %v1110 = vld [vmem:[%s1 + $0xc8] sm:$0xf]
      %v1111 = vld [vmem:[%s1 + $0xcc] sm:$0xf]
      %v1112 = vld [vmem:[%s1 + $0xd0] sm:$0xf]
      %v1113 = vld [vmem:[%s1 + $0xd4] sm:$0xf]
      %v1114 = vld [vmem:[%s1 + $0xd8] sm:$0xf]
      %v1115 = vld [vmem:[%s1 + $0xdc] sm:$0xf]
      %v1116 = vld [vmem:[%s1 + $0xe0] sm:$0xf]
      %v1117 = vld [vmem:[%s1 + $0xe4] sm:$0xf]
      %v1118 = vld [vmem:[%s1 + $0xe8] sm:$0xf]
      %v1119 = vld [vmem:[%s1 + $0xec] sm:$0xf]
      %v1120 = vld [vmem:[%s1 + $0xf0] sm:$0xf]
      %v1121 = vld [vmem:[%s1 + $0xf4] sm:$0xf]
      %v1122 = vld [vmem:[%s1 + $0xf8] sm:$0xf]
      %v1123 = vld [vmem:[%s1 + $0xfc] sm:$0xf]
      %v1124 = vld [vmem:[%s1 + $0x100] sm:$0xf]
      %v1125 = vld [vmem:[%s1 + $0x104] sm:$0xf]
      %v1126 = vld [vmem:[%s1 + $0x108] sm:$0xf]
      %v1127 = vld [vmem:[%s1 + $0x10c] sm:$0xf]
      %v1128 = vld [vmem:[%s1 + $0x110] sm:$0xf]
      %v1129 = vld [vmem:[%s1 + $0x114] sm:$0xf]
      %v1130 = vld [vmem:[%s1 + $0x118] sm:$0xf]
      %v1131 = vld [vmem:[%s1 + $0x11c] sm:$0xf]
      %v1132 = vld [vmem:[%s1 + $0x120] sm:$0xf]
      %v1133 = vld [vmem:[%s1 + $0x124] sm:$0xf]
      %v1134 = vld [vmem:[%s1 + $0x128] sm:$0xf]
      %v1135 = vld [vmem:[%s1 + $0x12c] sm:$0xf]
      %v1136 = vld [vmem:[%s1 + $0x130] sm:$0xf]
      %v1137 = vld [vmem:[%s1 + $0x134] sm:$0xf]
      %v1138 = vld [vmem:[%s1 + $0x138] sm:$0xf]
      %v1139 = vld [vmem:[%s1 + $0x13c] sm:$0xf]
      %v1140 = vld [vmem:[%s1 + $0x140] sm:$0xf]
      %v1141 = vld [vmem:[%s1 + $0x144] sm:$0xf]
      %v1142 = vld [vmem:[%s1 + $0x148] sm:$0xf]
      %v1143 = vld [vmem:[%s1 + $0x14c] sm:$0xf]
      %v1144 = vld [vmem:[%s1 + $0x150] sm:$0xf]
      %v1145 = vld [vmem:[%s1 + $0x154] sm:$0xf]
      %v1146 = vld [vmem:[%s1 + $0x158] sm:$0xf]
      %v1147 = vld [vmem:[%s1 + $0x15c] sm:$0xf]
      %v1148 = vld [vmem:[%s1 + $0x160] sm:$0xf]
      %v1149 = vld [vmem:[%s1 + $0x164] sm:$0xf]
      %v1150 = vld [vmem:[%s1 + $0x168] sm:$0xf]
      %v1151 = vld [vmem:[%s1 + $0x16c] sm:$0xf]
      %v1152 = vld [vmem:[%s1 + $0x170] sm:$0xf]
      %v1153 = vld [vmem:[%s1 + $0x174] sm:$0xf]
      %v1154 = vld [vmem:[%s1 + $0x178] sm:$0xf]
      %v1155 = vld [vmem:[%s1 + $0x17c] sm:$0xf]
      %v1156 = vld [vmem:[%s1 + $0x180] sm:$0xf]
      %v1157 = vld [vmem:[%s1 + $0x184] sm:$0xf]
      %v1158 = vld [vmem:[%s1 + $0x188] sm:$0xf]
      %v1159 = vld [vmem:[%s1 + $0x18c] sm:$0xf]
      %v1160 = vld [vmem:[%s1 + $0x190] sm:$0xf]
      %v1161 = vld [vmem:[%s1 + $0x194] sm:$0xf]
      %v1162 = vld [vmem:[%s1 + $0x198] sm:$0xf]
      %v1163 = vld [vmem:[%s1 + $0x19c] sm:$0xf]
      %v1164 = vld [vmem:[%s1 + $0x1a0] sm:$0xf]
      %v1165 = vld [vmem:[%s1 + $0x1a4] sm:$0xf]
      %v1166 = vld [vmem:[%s1 + $0x1a8] sm:$0xf]
      %v1167 = vld [vmem:[%s1 + $0x1ac] sm:$0xf]
      %v1168 = vld [vmem:[%s1 + $0x1b0] sm:$0xf]
      %v1169 = vld [vmem:[%s1 + $0x1b4] sm:$0xf]
      %v1170 = vld [vmem:[%s1 + $0x1b8] sm:$0xf]
      %v1171 = vld [vmem:[%s1 + $0x1bc] sm:$0xf]
      %v1172 = vld [vmem:[%s1 + $0x1c0] sm:$0xf]
      %v1173 = vld [vmem:[%s1 + $0x1c4] sm:$0xf]
      %v1174 = vld [vmem:[%s1 + $0x1c8] sm:$0xf]
      %v1175 = vld [vmem:[%s1 + $0x1cc] sm:$0xf]
      %v1176 = vld [vmem:[%s1 + $0x1d0] sm:$0xf]
      %v1177 = vld [vmem:[%s1 + $0x1d4] sm:$0xf]
      %v1178 = vld [vmem:[%s1 + $0x1d8] sm:$0xf]
      %v1179 = vld [vmem:[%s1 + $0x1dc] sm:$0xf]
      %v1180 = vld [vmem:[%s1 + $0x1e0] sm:$0xf]
      %v1181 = vld [vmem:[%s1 + $0x1e4] sm:$0xf]
      %v1182 = vld [vmem:[%s1 + $0x1e8] sm:$0xf]
      %v1183 = vld [vmem:[%s1 + $0x1ec] sm:$0xf]
      %v1184 = vld [vmem:[%s1 + $0x1f0] sm:$0xf]
      %v1185 = vld [vmem:[%s1 + $0x1f4] sm:$0xf]
      %v1186 = vld [vmem:[%s1 + $0x1f8] sm:$0xf]
      %v1187 = vld [vmem:[%s1 + $0x1fc] sm:$0xf]
      %v1188 = vld [vmem:[%s1 + $0x200] sm:$0xf]
      %v1189 = vld [vmem:[%s1 + $0x204] sm:$0xf]
      %v1190 = vld [vmem:[%s1 + $0x208] sm:$0xf]
      %v1191 = vld [vmem:[%s1 + $0x20c] sm:$0xf]
      %v1192 = vld [vmem:[%s1 + $0x210] sm:$0xf]
      %v1193 = vld [vmem:[%s1 + $0x214] sm:$0xf]
      %v1194 = vld [vmem:[%s1 + $0x218] sm:$0xf]
      %v1195 = vld [vmem:[%s1 + $0x21c] sm:$0xf]
      %v1196 = vld [vmem:[%s1 + $0x220] sm:$0xf]
      %v1197 = vld [vmem:[%s1 + $0x224] sm:$0xf]
      %v1198 = vld [vmem:[%s1 + $0x228] sm:$0xf]
      %v1199 = vld [vmem:[%s1 + $0x22c] sm:$0xf]
      %v1200 = vld [vmem:[%s1 + $0x230] sm:$0xf]
      %v1201 = vld [vmem:[%s1 + $0x234] sm:$0xf]
      %v1202 = vld [vmem:[%s1 + $0x238] sm:$0xf]
      %v1203 = vld [vmem:[%s1 + $0x23c] sm:$0xf]
      %v1204 = vld [vmem:[%s2] sm:$0x1]
      %v1206 = vlaneseq
      %v1207 = vshrl.u32 %v1206, 7
      %v1208 = vsub.s32 0, %v1207
      %v1209 = vrot.slane %v1204, %v1208
      %v1355 = vunpack.c.l.b16 %v1060
      %v1356 = vunpack.c.l.b16 %v1061
      %v1357 = vunpack.c.l.b16 %v1062
      %v1358 = vunpack.c.l.b16 %v1063
      %v1359 = vunpack.c.l.b16 %v1064
      %v1360 = vunpack.c.l.b16 %v1065
      %v1361 = vunpack.c.l.b16 %v1066
      %v1362 = vunpack.c.l.b16 %v1067
      %v1363 = vunpack.c.l.b16 %v1068
      %v1364 = vunpack.c.l.b16 %v1069
      %v1365 = vunpack.c.l.b16 %v1070
      %v1366 = vunpack.c.l.b16 %v1071
      %v1367 = vunpack.c.l.b16 %v1072
      %v1368 = vunpack.c.l.b16 %v1073
      %v1369 = vunpack.c.l.b16 %v1074
      %v1370 = vunpack.c.l.b16 %v1075
      %v1371 = vunpack.c.l.b16 %v1076
      %v1372 = vunpack.c.l.b16 %v1077
      %v1373 = vunpack.c.l.b16 %v1078
      %v1374 = vunpack.c.l.b16 %v1079
      %v1375 = vunpack.c.l.b16 %v1080
      %v1376 = vunpack.c.l.b16 %v1081
      %v1377 = vunpack.c.l.b16 %v1082
      %v1378 = vunpack.c.l.b16 %v1083
      %v1379 = vunpack.c.l.b16 %v1084
      %v1380 = vunpack.c.l.b16 %v1085
      %v1381 = vunpack.c.l.b16 %v1086
      %v1382 = vunpack.c.l.b16 %v1087
      %v1383 = vunpack.c.l.b16 %v1088
      %v1384 = vunpack.c.l.b16 %v1089
      %v1385 = vunpack.c.l.b16 %v1090
      %v1386 = vunpack.c.l.b16 %v1091
      %v1387 = vunpack.c.l.b16 %v1092
      %v1388 = vunpack.c.l.b16 %v1093
      %v1389 = vunpack.c.l.b16 %v1094
      %v1390 = vunpack.c.l.b16 %v1095
      %v1391 = vunpack.c.l.b16 %v1096
      %v1392 = vunpack.c.l.b16 %v1097
      %v1393 = vunpack.c.l.b16 %v1098
      %v1394 = vunpack.c.l.b16 %v1099
      %v1395 = vunpack.c.l.b16 %v1100
      %v1396 = vunpack.c.l.b16 %v1101
      %v1397 = vunpack.c.l.b16 %v1102
      %v1398 = vunpack.c.l.b16 %v1103
      %v1399 = vunpack.c.l.b16 %v1104
      %v1400 = vunpack.c.l.b16 %v1105
      %v1401 = vunpack.c.l.b16 %v1106
      %v1402 = vunpack.c.l.b16 %v1107
      %v1403 = vunpack.c.l.b16 %v1108
      %v1404 = vunpack.c.l.b16 %v1109
      %v1405 = vunpack.c.l.b16 %v1110
      %v1406 = vunpack.c.l.b16 %v1111
      %v1407 = vunpack.c.l.b16 %v1112
      %v1408 = vunpack.c.l.b16 %v1113
      %v1409 = vunpack.c.l.b16 %v1114
      %v1410 = vunpack.c.l.b16 %v1115
      %v1411 = vunpack.c.l.b16 %v1116
      %v1412 = vunpack.c.l.b16 %v1117
      %v1413 = vunpack.c.l.b16 %v1118
      %v1414 = vunpack.c.l.b16 %v1119
      %v1415 = vunpack.c.l.b16 %v1120
      %v1416 = vunpack.c.l.b16 %v1121
      %v1417 = vunpack.c.l.b16 %v1122
      %v1418 = vunpack.c.l.b16 %v1123
      %v1419 = vunpack.c.l.b16 %v1124
      %v1420 = vunpack.c.l.b16 %v1125
      %v1421 = vunpack.c.l.b16 %v1126
      %v1422 = vunpack.c.l.b16 %v1127
      %v1423 = vunpack.c.l.b16 %v1128
      %v1424 = vunpack.c.l.b16 %v1129
      %v1425 = vunpack.c.l.b16 %v1130
      %v1426 = vunpack.c.l.b16 %v1131
      %v1427 = vunpack.c.l.b16 %v1132
      %v1428 = vunpack.c.l.b16 %v1133
      %v1429 = vunpack.c.l.b16 %v1134
      %v1430 = vunpack.c.l.b16 %v1135
      %v1431 = vunpack.c.l.b16 %v1136
      %v1432 = vunpack.c.l.b16 %v1137
      %v1433 = vunpack.c.l.b16 %v1138
      %v1434 = vunpack.c.l.b16 %v1139
      %v1435 = vunpack.c.l.b16 %v1140
      %v1436 = vunpack.c.l.b16 %v1141
      %v1437 = vunpack.c.l.b16 %v1142
      %v1438 = vunpack.c.l.b16 %v1143
      %v1439 = vunpack.c.l.b16 %v1144
      %v1440 = vunpack.c.l.b16 %v1145
      %v1441 = vunpack.c.l.b16 %v1146
      %v1442 = vunpack.c.l.b16 %v1147
      %v1443 = vunpack.c.l.b16 %v1148
      %v1444 = vunpack.c.l.b16 %v1149
      %v1445 = vunpack.c.l.b16 %v1150
      %v1446 = vunpack.c.l.b16 %v1151
      %v1447 = vunpack.c.l.b16 %v1152
      %v1448 = vunpack.c.l.b16 %v1153
      %v1449 = vunpack.c.l.b16 %v1154
      %v1450 = vunpack.c.l.b16 %v1155
      %v1451 = vunpack.c.l.b16 %v1156
      %v1452 = vunpack.c.l.b16 %v1157
      %v1453 = vunpack.c.l.b16 %v1158
      %v1454 = vunpack.c.l.b16 %v1159
      %v1455 = vunpack.c.l.b16 %v1160
      %v1456 = vunpack.c.l.b16 %v1161
      %v1457 = vunpack.c.l.b16 %v1162
      %v1458 = vunpack.c.l.b16 %v1163
      %v1459 = vunpack.c.l.b16 %v1164
      %v1460 = vunpack.c.l.b16 %v1165
      %v1461 = vunpack.c.l.b16 %v1166
      %v1462 = vunpack.c.l.b16 %v1167
      %v1463 = vunpack.c.l.b16 %v1168
      %v1464 = vunpack.c.l.b16 %v1169
      %v1465 = vunpack.c.l.b16 %v1170
      %v1466 = vunpack.c.l.b16 %v1171
      %v1467 = vunpack.c.l.b16 %v1172
      %v1468 = vunpack.c.l.b16 %v1173
      %v1469 = vunpack.c.l.b16 %v1174
      %v1470 = vunpack.c.l.b16 %v1175
      %v1471 = vunpack.c.l.b16 %v1176
      %v1472 = vunpack.c.l.b16 %v1177
      %v1473 = vunpack.c.l.b16 %v1178
      %v1474 = vunpack.c.l.b16 %v1179
      %v1475 = vunpack.c.l.b16 %v1180
      %v1476 = vunpack.c.l.b16 %v1181
      %v1477 = vunpack.c.l.b16 %v1182
      %v1478 = vunpack.c.l.b16 %v1183
      %v1479 = vunpack.c.l.b16 %v1184
      %v1480 = vunpack.c.l.b16 %v1185
      %v1481 = vunpack.c.l.b16 %v1186
      %v1482 = vunpack.c.l.b16 %v1187
      %v1483 = vunpack.c.l.b16 %v1188
      %v1484 = vunpack.c.l.b16 %v1189
      %v1485 = vunpack.c.l.b16 %v1190
      %v1486 = vunpack.c.l.b16 %v1191
      %v1487 = vunpack.c.l.b16 %v1192
      %v1488 = vunpack.c.l.b16 %v1193
      %v1489 = vunpack.c.l.b16 %v1194
      %v1490 = vunpack.c.l.b16 %v1195
      %v1491 = vunpack.c.l.b16 %v1196
      %v1492 = vunpack.c.l.b16 %v1197
      %v1493 = vunpack.c.l.b16 %v1198
      %v1494 = vunpack.c.l.b16 %v1199
      %v1495 = vunpack.c.l.b16 %v1200
      %v1496 = vunpack.c.l.b16 %v1201
      %v1497 = vunpack.c.l.b16 %v1202
      %v1498 = vunpack.c.l.b16 %v1203
      %v1499 = vpack.c.b16 %v1356, %v1355
      %v1500 = vpack.c.b16 %v1358, %v1357
      %v1501 = vpack.c.b16 %v1360, %v1359
      %v1502 = vpack.c.b16 %v1362, %v1361
      %v1503 = vpack.c.b16 %v1364, %v1363
      %v1504 = vpack.c.b16 %v1366, %v1365
      %v1505 = vpack.c.b16 %v1368, %v1367
      %v1506 = vpack.c.b16 %v1370, %v1369
      %v1507 = vpack.c.b16 %v1372, %v1371
      %v1508 = vpack.c.b16 %v1374, %v1373
      %v1509 = vpack.c.b16 %v1376, %v1375
      %v1510 = vpack.c.b16 %v1378, %v1377
      %v1511 = vpack.c.b16 %v1380, %v1379
      %v1512 = vpack.c.b16 %v1382, %v1381
      %v1513 = vpack.c.b16 %v1384, %v1383
      %v1514 = vpack.c.b16 %v1386, %v1385
      %v1515 = vpack.c.b16 %v1388, %v1387
      %v1516 = vpack.c.b16 %v1390, %v1389
      %v1517 = vpack.c.b16 %v1392, %v1391
      %v1518 = vpack.c.b16 %v1394, %v1393
      %v1519 = vpack.c.b16 %v1396, %v1395
      %v1520 = vpack.c.b16 %v1398, %v1397
      %v1521 = vpack.c.b16 %v1400, %v1399
      %v1522 = vpack.c.b16 %v1402, %v1401
      %v1523 = vpack.c.b16 %v1404, %v1403
      %v1524 = vpack.c.b16 %v1406, %v1405
      %v1525 = vpack.c.b16 %v1408, %v1407
      %v1526 = vpack.c.b16 %v1410, %v1409
      %v1527 = vpack.c.b16 %v1412, %v1411
      %v1528 = vpack.c.b16 %v1414, %v1413
      %v1529 = vpack.c.b16 %v1416, %v1415
      %v1530 = vpack.c.b16 %v1418, %v1417
      %v1531 = vpack.c.b16 %v1420, %v1419
      %v1532 = vpack.c.b16 %v1422, %v1421
      %v1533 = vpack.c.b16 %v1424, %v1423
      %v1534 = vpack.c.b16 %v1426, %v1425
      %v1535 = vpack.c.b16 %v1428, %v1427
      %v1536 = vpack.c.b16 %v1430, %v1429
      %v1537 = vpack.c.b16 %v1432, %v1431
      %v1538 = vpack.c.b16 %v1434, %v1433
      %v1539 = vpack.c.b16 %v1436, %v1435
      %v1540 = vpack.c.b16 %v1438, %v1437
      %v1541 = vpack.c.b16 %v1440, %v1439
      %v1542 = vpack.c.b16 %v1442, %v1441
      %v1543 = vpack.c.b16 %v1444, %v1443
      %v1544 = vpack.c.b16 %v1446, %v1445
      %v1545 = vpack.c.b16 %v1448, %v1447
      %v1546 = vpack.c.b16 %v1450, %v1449
      %v1547 = vpack.c.b16 %v1452, %v1451
      %v1548 = vpack.c.b16 %v1454, %v1453
      %v1549 = vpack.c.b16 %v1456, %v1455
      %v1550 = vpack.c.b16 %v1458, %v1457
      %v1551 = vpack.c.b16 %v1460, %v1459
      %v1552 = vpack.c.b16 %v1462, %v1461
      %v1553 = vpack.c.b16 %v1464, %v1463
      %v1554 = vpack.c.b16 %v1466, %v1465
      %v1555 = vpack.c.b16 %v1468, %v1467
      %v1556 = vpack.c.b16 %v1470, %v1469
      %v1557 = vpack.c.b16 %v1472, %v1471
      %v1558 = vpack.c.b16 %v1474, %v1473
      %v1559 = vpack.c.b16 %v1476, %v1475
      %v1560 = vpack.c.b16 %v1478, %v1477
      %v1561 = vpack.c.b16 %v1480, %v1479
      %v1562 = vpack.c.b16 %v1482, %v1481
      %v1563 = vpack.c.b16 %v1484, %v1483
      %v1564 = vpack.c.b16 %v1486, %v1485
      %v1565 = vpack.c.b16 %v1488, %v1487
      %v1566 = vpack.c.b16 %v1490, %v1489
      %v1567 = vpack.c.b16 %v1492, %v1491
      %v1568 = vpack.c.b16 %v1494, %v1493
      %v1569 = vpack.c.b16 %v1496, %v1495
      %v1570 = vpack.c.b16 %v1498, %v1497
      %1643 = vmatprep.subr.bf16.mxu0 0
      %1644 = vmatpush1.bf16.msra.mxu0 %v1506
      %1645 = vmatprep.subr.bf16.mxu0 0
      %1646 = vmatpush1.bf16.msra.mxu0 %v1505
      %1647 = vmatprep.subr.bf16.mxu0 0
      %1648 = vmatpush1.bf16.msra.mxu0 %v1504
      %1649 = vmatprep.subr.bf16.mxu0 0
      %1650 = vmatpush1.bf16.msra.mxu0 %v1503
      %1651 = vmatprep.subr.bf16.mxu0 0
      %1652 = vmatpush1.bf16.msra.mxu0 %v1502
      %1653 = vmatprep.subr.bf16.mxu0 0
      %1654 = vmatpush1.bf16.msra.mxu0 %v1501
      %1655 = vmatprep.subr.bf16.mxu0 0
      %1656 = vmatpush1.bf16.msra.mxu0 %v1500
      %1657 = vmatprep.subr.bf16.mxu0 0
      %1658 = vmatpush1.bf16.msra.mxu0 %v1499
      %1659 = vmatprep.subr.bf16.mxu0 0
      %1660 = vmatpush2.bf16.msra.mxu0 %v1514
      %1661 = vmatprep.subr.bf16.mxu0 0
      %1662 = vmatpush2.bf16.msra.mxu0 %v1513
      %1663 = vmatprep.subr.bf16.mxu0 0
      %1664 = vmatpush2.bf16.msra.mxu0 %v1512
      %1665 = vmatprep.subr.bf16.mxu0 0
      %1666 = vmatpush2.bf16.msra.mxu0 %v1511
      %1667 = vmatprep.subr.bf16.mxu0 0
      %1668 = vmatpush2.bf16.msra.mxu0 %v1510
      %1669 = vmatprep.subr.bf16.mxu0 0
      %1670 = vmatpush2.bf16.msra.mxu0 %v1509
      %1671 = vmatprep.subr.bf16.mxu0 0
      %1672 = vmatpush2.bf16.msra.mxu0 %v1508
      %1673 = vmatprep.subr.bf16.mxu0 0
      %1674 = vmatpush2.bf16.msra.mxu0 %v1507
      %1675 = vmatprep.mubr.bf16.mxu0 %v940
      %1676 = vmatmul.mubr.bf16.gmra.mxu0 %v876
      %v1677 = vpop.f32.mrf.mxu0
      %v1678 = vadd.f32 %v1209, %v1677
      %v1679 = vpop.f32.mrf.mxu0
      %v1680 = vpop.f32.mrf.mxu0
      %v1681 = vadd.f32 %v1209, %v1680
      %v1682 = vpop.f32.mrf.mxu0
      %1683 = vmatprep.mubr.bf16.mxu0 %v941
      %1684 = vmatmul.mubr.bf16.gmra.mxu0 %v877
      %v1685 = vpop.f32.mrf.mxu0
      %v1686 = vadd.f32 %v1209, %v1685
      %v1687 = vpop.f32.mrf.mxu0
      %v1688 = vpop.f32.mrf.mxu0
      %v1689 = vadd.f32 %v1209, %v1688
      %v1690 = vpop.f32.mrf.mxu0
      %1691 = vmatprep.mubr.bf16.mxu0 %v942
      %1692 = vmatmul.mubr.bf16.gmra.mxu0 %v878
      %v1693 = vpop.f32.mrf.mxu0
      %v1694 = vadd.f32 %v1209, %v1693
      %v1695 = vpop.f32.mrf.mxu0
      %v1696 = vpop.f32.mrf.mxu0
      %v1697 = vadd.f32 %v1209, %v1696
      %v1698 = vpop.f32.mrf.mxu0
      %1699 = vmatprep.mubr.bf16.mxu0 %v943
      %1700 = vmatmul.mubr.bf16.gmra.mxu0 %v879
      %v1701 = vpop.f32.mrf.mxu0
      %v1702 = vadd.f32 %v1209, %v1701
      %v1703 = vpop.f32.mrf.mxu0
      %v1704 = vpop.f32.mrf.mxu0
      %v1705 = vadd.f32 %v1209, %v1704
      %v1706 = vpop.f32.mrf.mxu0
      %1707 = vmatprep.mubr.bf16.mxu0 %v944
      %1708 = vmatmul.mubr.bf16.gmra.mxu0 %v880
      %v1709 = vpop.f32.mrf.mxu0
      %v1710 = vadd.f32 %v1209, %v1709
      %v1711 = vpop.f32.mrf.mxu0
      %v1712 = vpop.f32.mrf.mxu0
      %v1713 = vadd.f32 %v1209, %v1712
      %v1714 = vpop.f32.mrf.mxu0
      %1715 = vmatprep.mubr.bf16.mxu0 %v945
      %1716 = vmatmul.mubr.bf16.gmra.mxu0 %v881
      %v1717 = vpop.f32.mrf.mxu0
      %v1718 = vadd.f32 %v1209, %v1717
      %v1719 = vpop.f32.mrf.mxu0
      %v1720 = vpop.f32.mrf.mxu0
      %v1721 = vadd.f32 %v1209, %v1720
      %v1722 = vpop.f32.mrf.mxu0
      %1723 = vmatprep.mubr.bf16.mxu0 %v946
      %1724 = vmatmul.mubr.bf16.gmra.mxu0 %v882
      %v1725 = vpop.f32.mrf.mxu0
      %v1726 = vadd.f32 %v1209, %v1725
      %v1727 = vpop.f32.mrf.mxu0
      %v1728 = vpop.f32.mrf.mxu0
      %v1729 = vadd.f32 %v1209, %v1728
      %v1730 = vpop.f32.mrf.mxu0
      %1731 = vmatprep.mubr.bf16.mxu0 %v947
      %1732 = vmatmul.mubr.bf16.gmra.mxu0 %v883
      %v1733 = vpop.f32.mrf.mxu0
      %v1734 = vadd.f32 %v1209, %v1733
      %v1735 = vpop.f32.mrf.mxu0
      %v1736 = vpop.f32.mrf.mxu0
      %v1737 = vadd.f32 %v1209, %v1736
      %v1738 = vpop.f32.mrf.mxu0
      %1739 = vmatprep.mubr.bf16.mxu0 %v948
      %1740 = vmatmul.mubr.bf16.gmra.mxu0 %v884
      %v1741 = vpop.f32.mrf.mxu0
      %v1742 = vadd.f32 %v1209, %v1741
      %v1743 = vpop.f32.mrf.mxu0
      %v1744 = vpop.f32.mrf.mxu0
      %v1745 = vadd.f32 %v1209, %v1744
      %v1746 = vpop.f32.mrf.mxu0
      %1747 = vmatprep.mubr.bf16.mxu0 %v949
      %1748 = vmatmul.mubr.bf16.gmra.mxu0 %v885
      %v1749 = vpop.f32.mrf.mxu0
      %v1750 = vadd.f32 %v1209, %v1749
      %v1751 = vpop.f32.mrf.mxu0
      %v1752 = vpop.f32.mrf.mxu0
      %v1753 = vadd.f32 %v1209, %v1752
      %v1754 = vpop.f32.mrf.mxu0
      %1755 = vmatprep.mubr.bf16.mxu0 %v950
      %1756 = vmatmul.mubr.bf16.gmra.mxu0 %v886
      %v1757 = vpop.f32.mrf.mxu0
      %v1758 = vadd.f32 %v1209, %v1757
      %v1759 = vpop.f32.mrf.mxu0
      %v1760 = vpop.f32.mrf.mxu0
      %v1761 = vadd.f32 %v1209, %v1760
      %v1762 = vpop.f32.mrf.mxu0
      %1763 = vmatprep.mubr.bf16.mxu0 %v951
      %1764 = vmatmul.mubr.bf16.gmra.mxu0 %v887
      %v1765 = vpop.f32.mrf.mxu0
      %v1766 = vadd.f32 %v1209, %v1765
      %v1767 = vpop.f32.mrf.mxu0
      %v1768 = vpop.f32.mrf.mxu0
      %v1769 = vadd.f32 %v1209, %v1768
      %v1770 = vpop.f32.mrf.mxu0
      %1771 = vmatprep.mubr.bf16.mxu0 %v952
      %1772 = vmatmul.mubr.bf16.gmra.mxu0 %v888
      %v1773 = vpop.f32.mrf.mxu0
      %v1774 = vadd.f32 %v1209, %v1773
      %v1775 = vpop.f32.mrf.mxu0
      %v1776 = vpop.f32.mrf.mxu0
      %v1777 = vadd.f32 %v1209, %v1776
      %v1778 = vpop.f32.mrf.mxu0
      %1779 = vmatprep.mubr.bf16.mxu0 %v953
      %1780 = vmatmul.mubr.bf16.gmra.mxu0 %v889
      %v1781 = vpop.f32.mrf.mxu0
      %v1782 = vadd.f32 %v1209, %v1781
      %v1783 = vpop.f32.mrf.mxu0
      %v1784 = vpop.f32.mrf.mxu0
      %v1785 = vadd.f32 %v1209, %v1784
      %v1786 = vpop.f32.mrf.mxu0
      %1787 = vmatprep.mubr.bf16.mxu0 %v954
      %1788 = vmatmul.mubr.bf16.gmra.mxu0 %v890
      %v1789 = vpop.f32.mrf.mxu0
      %v1790 = vadd.f32 %v1209, %v1789
      %v1791 = vpop.f32.mrf.mxu0
      %v1792 = vpop.f32.mrf.mxu0
      %v1793 = vadd.f32 %v1209, %v1792
      %v1794 = vpop.f32.mrf.mxu0
      %1795 = vmatprep.mubr.bf16.mxu0 %v955
      %1796 = vmatmul.mubr.bf16.gmra.mxu0 %v891
      %v1797 = vpop.f32.mrf.mxu0
      %v1798 = vadd.f32 %v1209, %v1797
      %v1799 = vpop.f32.mrf.mxu0
      %v1800 = vpop.f32.mrf.mxu0
      %v1801 = vadd.f32 %v1209, %v1800
      %v1802 = vpop.f32.mrf.mxu0
      %1803 = vdwg.mxu0
      %1804 = vmatprep.subr.bf16.mxu0 0
      %1805 = vmatpush1.bf16.msra.mxu0 %v1522
      %1806 = vmatprep.subr.bf16.mxu0 0
      %1807 = vmatpush1.bf16.msra.mxu0 %v1521
      %1808 = vmatprep.subr.bf16.mxu0 0
      %1809 = vmatpush1.bf16.msra.mxu0 %v1520
      %1810 = vmatprep.subr.bf16.mxu0 0
      %1811 = vmatpush1.bf16.msra.mxu0 %v1519
      %1812 = vmatprep.subr.bf16.mxu0 0
      %1813 = vmatpush1.bf16.msra.mxu0 %v1518
      %1814 = vmatprep.subr.bf16.mxu0 0
      %1815 = vmatpush1.bf16.msra.mxu0 %v1517
      %1816 = vmatprep.subr.bf16.mxu0 0
      %1817 = vmatpush1.bf16.msra.mxu0 %v1516
      %1818 = vmatprep.subr.bf16.mxu0 0
      %1819 = vmatpush1.bf16.msra.mxu0 %v1515
      %1820 = vmatprep.subr.bf16.mxu0 0
      %1821 = vmatpush2.bf16.msra.mxu0 %v1530
      %1822 = vmatprep.subr.bf16.mxu0 0
      %1823 = vmatpush2.bf16.msra.mxu0 %v1529
      %1824 = vmatprep.subr.bf16.mxu0 0
      %1825 = vmatpush2.bf16.msra.mxu0 %v1528
      %1826 = vmatprep.subr.bf16.mxu0 0
      %1827 = vmatpush2.bf16.msra.mxu0 %v1527
      %1828 = vmatprep.subr.bf16.mxu0 0
      %1829 = vmatpush2.bf16.msra.mxu0 %v1526
      %1830 = vmatprep.subr.bf16.mxu0 0
      %1831 = vmatpush2.bf16.msra.mxu0 %v1525
      %1832 = vmatprep.subr.bf16.mxu0 0
      %1833 = vmatpush2.bf16.msra.mxu0 %v1524
      %1834 = vmatprep.subr.bf16.mxu0 0
      %1835 = vmatpush2.bf16.msra.mxu0 %v1523
      %1836 = vmatprep.mubr.bf16.mxu0 %v877
      %1837 = vmatmul.mubr.bf16.gmra.mxu0 %v1004
      %v1838 = vpop.f32.mrf.mxu0
      %v1839 = vadd.f32 %v1678, %v1838
      %v1840 = vpop.f32.mrf.mxu0
      %v1841 = vpop.f32.mrf.mxu0
      %v1842 = vadd.f32 %v1681, %v1841
      %v1843 = vpop.f32.mrf.mxu0
      %1844 = vmatprep.mubr.bf16.mxu0 %v878
      %1845 = vmatmul.mubr.bf16.gmra.mxu0 %v1005
      %v1846 = vpop.f32.mrf.mxu0
      %v1847 = vadd.f32 %v1686, %v1846
      %v1848 = vpop.f32.mrf.mxu0
      %v1849 = vpop.f32.mrf.mxu0
      %v1850 = vadd.f32 %v1689, %v1849
      %v1851 = vpop.f32.mrf.mxu0
      %1852 = vmatprep.mubr.bf16.mxu0 %v879
      %1853 = vmatmul.mubr.bf16.gmra.mxu0 %v1006
      %v1854 = vpop.f32.mrf.mxu0
      %v1855 = vadd.f32 %v1694, %v1854
      %v1856 = vpop.f32.mrf.mxu0
      %v1857 = vpop.f32.mrf.mxu0
      %v1858 = vadd.f32 %v1697, %v1857
      %v1859 = vpop.f32.mrf.mxu0
      %1860 = vmatprep.mubr.bf16.mxu0 %v880
      %1861 = vmatmul.mubr.bf16.gmra.mxu0 %v1007
      %v1862 = vpop.f32.mrf.mxu0
      %v1863 = vadd.f32 %v1702, %v1862
      %v1864 = vpop.f32.mrf.mxu0
      %v1865 = vpop.f32.mrf.mxu0
      %v1866 = vadd.f32 %v1705, %v1865
      %v1867 = vpop.f32.mrf.mxu0
      %1868 = vmatprep.mubr.bf16.mxu0 %v881
      %1869 = vmatmul.mubr.bf16.gmra.mxu0 %v1008
      %v1870 = vpop.f32.mrf.mxu0
      %v1871 = vadd.f32 %v1710, %v1870
      %v1872 = vpop.f32.mrf.mxu0
      %v1873 = vpop.f32.mrf.mxu0
      %v1874 = vadd.f32 %v1713, %v1873
      %v1875 = vpop.f32.mrf.mxu0
      %1876 = vmatprep.mubr.bf16.mxu0 %v882
      %1877 = vmatmul.mubr.bf16.gmra.mxu0 %v1009
      %v1878 = vpop.f32.mrf.mxu0
      %v1879 = vadd.f32 %v1718, %v1878
      %v1880 = vpop.f32.mrf.mxu0
      %v1881 = vpop.f32.mrf.mxu0
      %v1882 = vadd.f32 %v1721, %v1881
      %v1883 = vpop.f32.mrf.mxu0
      %1884 = vmatprep.mubr.bf16.mxu0 %v883
      %1885 = vmatmul.mubr.bf16.gmra.mxu0 %v1010
      %v1886 = vpop.f32.mrf.mxu0
      %v1887 = vadd.f32 %v1726, %v1886
      %v1888 = vpop.f32.mrf.mxu0
      %v1889 = vpop.f32.mrf.mxu0
      %v1890 = vadd.f32 %v1729, %v1889
      %v1891 = vpop.f32.mrf.mxu0
      %1892 = vmatprep.mubr.bf16.mxu0 %v884
      %1893 = vmatmul.mubr.bf16.gmra.mxu0 %v1011
      %v1894 = vpop.f32.mrf.mxu0
      %v1895 = vadd.f32 %v1734, %v1894
      %v1896 = vpop.f32.mrf.mxu0
      %v1897 = vpop.f32.mrf.mxu0
      %v1898 = vadd.f32 %v1737, %v1897
      %v1899 = vpop.f32.mrf.mxu0
      %1900 = vmatprep.mubr.bf16.mxu0 %v885
      %1901 = vmatmul.mubr.bf16.gmra.mxu0 %v1012
      %v1902 = vpop.f32.mrf.mxu0
      %v1903 = vadd.f32 %v1742, %v1902
      %v1904 = vpop.f32.mrf.mxu0
      %v1905 = vpop.f32.mrf.mxu0
      %v1906 = vadd.f32 %v1745, %v1905
      %v1907 = vpop.f32.mrf.mxu0
      %1908 = vmatprep.mubr.bf16.mxu0 %v886
      %1909 = vmatmul.mubr.bf16.gmra.mxu0 %v1013
      %v1910 = vpop.f32.mrf.mxu0
      %v1911 = vadd.f32 %v1750, %v1910
      %v1912 = vpop.f32.mrf.mxu0
      %v1913 = vpop.f32.mrf.mxu0
      %v1914 = vadd.f32 %v1753, %v1913
      %v1915 = vpop.f32.mrf.mxu0
      %1916 = vmatprep.mubr.bf16.mxu0 %v887
      %1917 = vmatmul.mubr.bf16.gmra.mxu0 %v1014
      %v1918 = vpop.f32.mrf.mxu0
      %v1919 = vadd.f32 %v1758, %v1918
      %v1920 = vpop.f32.mrf.mxu0
      %v1921 = vpop.f32.mrf.mxu0
      %v1922 = vadd.f32 %v1761, %v1921
      %v1923 = vpop.f32.mrf.mxu0
      %1924 = vmatprep.mubr.bf16.mxu0 %v888
      %1925 = vmatmul.mubr.bf16.gmra.mxu0 %v1015
      %v1926 = vpop.f32.mrf.mxu0
      %v1927 = vadd.f32 %v1766, %v1926
      %v1928 = vpop.f32.mrf.mxu0
      %v1929 = vpop.f32.mrf.mxu0
      %v1930 = vadd.f32 %v1769, %v1929
      %v1931 = vpop.f32.mrf.mxu0
      %1932 = vmatprep.mubr.bf16.mxu0 %v889
      %1933 = vmatmul.mubr.bf16.gmra.mxu0 %v1016
      %v1934 = vpop.f32.mrf.mxu0
      %v1935 = vadd.f32 %v1774, %v1934
      %v1936 = vpop.f32.mrf.mxu0
      %v1937 = vpop.f32.mrf.mxu0
      %v1938 = vadd.f32 %v1777, %v1937
      %v1939 = vpop.f32.mrf.mxu0
      %1940 = vmatprep.mubr.bf16.mxu0 %v890
      %1941 = vmatmul.mubr.bf16.gmra.mxu0 %v1017
      %v1942 = vpop.f32.mrf.mxu0
      %v1943 = vadd.f32 %v1782, %v1942
      %v1944 = vpop.f32.mrf.mxu0
      %v1945 = vpop.f32.mrf.mxu0
      %v1946 = vadd.f32 %v1785, %v1945
      %v1947 = vpop.f32.mrf.mxu0
      %1948 = vmatprep.mubr.bf16.mxu0 %v891
      %1949 = vmatmul.mubr.bf16.gmra.mxu0 %v1018
      %v1950 = vpop.f32.mrf.mxu0
      %v1951 = vadd.f32 %v1790, %v1950
      %v1952 = vpop.f32.mrf.mxu0
      %v1953 = vpop.f32.mrf.mxu0
      %v1954 = vadd.f32 %v1793, %v1953
      %v1955 = vpop.f32.mrf.mxu0
      %1956 = vmatprep.mubr.bf16.mxu0 %v1038
      %1957 = vmatmul.mubr.bf16.gmra.mxu0 %v1019
      %v1958 = vpop.f32.mrf.mxu0
      %v1959 = vadd.f32 %v1798, %v1958
      %v1960 = vpop.f32.mrf.mxu0
      %v1961 = vpop.f32.mrf.mxu0
      %v1962 = vadd.f32 %v1801, %v1961
      %v1963 = vpop.f32.mrf.mxu0
      %1964 = vdwg.mxu0
      %1965 = vmatprep.subr.bf16.mxu0 0
      %1966 = vmatpush1.bf16.msra.mxu0 %v1538
      %1967 = vmatprep.subr.bf16.mxu0 0
      %1968 = vmatpush1.bf16.msra.mxu0 %v1537
      %1969 = vmatprep.subr.bf16.mxu0 0
      %1970 = vmatpush1.bf16.msra.mxu0 %v1536
      %1971 = vmatprep.subr.bf16.mxu0 0
      %1972 = vmatpush1.bf16.msra.mxu0 %v1535
      %1973 = vmatprep.subr.bf16.mxu0 0
      %1974 = vmatpush1.bf16.msra.mxu0 %v1534
      %1975 = vmatprep.subr.bf16.mxu0 0
      %1976 = vmatpush1.bf16.msra.mxu0 %v1533
      %1977 = vmatprep.subr.bf16.mxu0 0
      %1978 = vmatpush1.bf16.msra.mxu0 %v1532
      %1979 = vmatprep.subr.bf16.mxu0 0
      %1980 = vmatpush1.bf16.msra.mxu0 %v1531
      %1981 = vmatprep.subr.bf16.mxu0 0
      %1982 = vmatpush2.bf16.msra.mxu0 %v1546
      %1983 = vmatprep.subr.bf16.mxu0 0
      %1984 = vmatpush2.bf16.msra.mxu0 %v1545
      %1985 = vmatprep.subr.bf16.mxu0 0
      %1986 = vmatpush2.bf16.msra.mxu0 %v1544
      %1987 = vmatprep.subr.bf16.mxu0 0
      %1988 = vmatpush2.bf16.msra.mxu0 %v1543
      %1989 = vmatprep.subr.bf16.mxu0 0
      %1990 = vmatpush2.bf16.msra.mxu0 %v1542
      %1991 = vmatprep.subr.bf16.mxu0 0
      %1992 = vmatpush2.bf16.msra.mxu0 %v1541
      %1993 = vmatprep.subr.bf16.mxu0 0
      %1994 = vmatpush2.bf16.msra.mxu0 %v1540
      %1995 = vmatprep.subr.bf16.mxu0 0
      %1996 = vmatpush2.bf16.msra.mxu0 %v1539
      %1997 = vmatprep.mubr.bf16.mxu0 %v1005
      %1998 = vmatmul.mubr.bf16.gmra.mxu0 %v941
      %v1999 = vpop.f32.mrf.mxu0
      %v2000 = vadd.f32 %v1839, %v1999
      %v2001 = vpop.f32.mrf.mxu0
      %v2002 = vpop.f32.mrf.mxu0
      %v2003 = vadd.f32 %v1842, %v2002
      %v2004 = vpop.f32.mrf.mxu0
      %2005 = vmatprep.mubr.bf16.mxu0 %v1006
      %2006 = vmatmul.mubr.bf16.gmra.mxu0 %v942
      %v2007 = vpop.f32.mrf.mxu0
      %v2008 = vadd.f32 %v1847, %v2007
      %v2009 = vpop.f32.mrf.mxu0
      %v2010 = vpop.f32.mrf.mxu0
      %v2011 = vadd.f32 %v1850, %v2010
      %v2012 = vpop.f32.mrf.mxu0
      %2013 = vmatprep.mubr.bf16.mxu0 %v1007
      %2014 = vmatmul.mubr.bf16.gmra.mxu0 %v943
      %v2015 = vpop.f32.mrf.mxu0
      %v2016 = vadd.f32 %v1855, %v2015
      %v2017 = vpop.f32.mrf.mxu0
      %v2018 = vpop.f32.mrf.mxu0
      %v2019 = vadd.f32 %v1858, %v2018
      %v2020 = vpop.f32.mrf.mxu0
      %2021 = vmatprep.mubr.bf16.mxu0 %v1008
      %2022 = vmatmul.mubr.bf16.gmra.mxu0 %v944
      %v2023 = vpop.f32.mrf.mxu0
      %v2024 = vadd.f32 %v1863, %v2023
      %v2025 = vpop.f32.mrf.mxu0
      %v2026 = vpop.f32.mrf.mxu0
      %v2027 = vadd.f32 %v1866, %v2026
      %v2028 = vpop.f32.mrf.mxu0
      %2029 = vmatprep.mubr.bf16.mxu0 %v1009
      %2030 = vmatmul.mubr.bf16.gmra.mxu0 %v945
      %v2031 = vpop.f32.mrf.mxu0
      %v2032 = vadd.f32 %v1871, %v2031
      %v2033 = vpop.f32.mrf.mxu0
      %v2034 = vpop.f32.mrf.mxu0
      %v2035 = vadd.f32 %v1874, %v2034
      %v2036 = vpop.f32.mrf.mxu0
      %2037 = vmatprep.mubr.bf16.mxu0 %v1010
      %2038 = vmatmul.mubr.bf16.gmra.mxu0 %v946
      %v2039 = vpop.f32.mrf.mxu0
      %v2040 = vadd.f32 %v1879, %v2039
      %v2041 = vpop.f32.mrf.mxu0
      %v2042 = vpop.f32.mrf.mxu0
      %v2043 = vadd.f32 %v1882, %v2042
      %v2044 = vpop.f32.mrf.mxu0
      %2045 = vmatprep.mubr.bf16.mxu0 %v1011
      %2046 = vmatmul.mubr.bf16.gmra.mxu0 %v947
      %v2047 = vpop.f32.mrf.mxu0
      %v2048 = vadd.f32 %v1887, %v2047
      %v2049 = vpop.f32.mrf.mxu0
      %v2050 = vpop.f32.mrf.mxu0
      %v2051 = vadd.f32 %v1890, %v2050
      %v2052 = vpop.f32.mrf.mxu0
      %2053 = vmatprep.mubr.bf16.mxu0 %v1012
      %2054 = vmatmul.mubr.bf16.gmra.mxu0 %v948
      %v2055 = vpop.f32.mrf.mxu0
      %v2056 = vadd.f32 %v1895, %v2055
      %v2057 = vpop.f32.mrf.mxu0
      %v2058 = vpop.f32.mrf.mxu0
      %v2059 = vadd.f32 %v1898, %v2058
      %v2060 = vpop.f32.mrf.mxu0
      %2061 = vmatprep.mubr.bf16.mxu0 %v1013
      %2062 = vmatmul.mubr.bf16.gmra.mxu0 %v949
      %v2063 = vpop.f32.mrf.mxu0
      %v2064 = vadd.f32 %v1903, %v2063
      %v2065 = vpop.f32.mrf.mxu0
      %v2066 = vpop.f32.mrf.mxu0
      %v2067 = vadd.f32 %v1906, %v2066
      %v2068 = vpop.f32.mrf.mxu0
      %2069 = vmatprep.mubr.bf16.mxu0 %v1014
      %2070 = vmatmul.mubr.bf16.gmra.mxu0 %v950
      %v2071 = vpop.f32.mrf.mxu0
      %v2072 = vadd.f32 %v1911, %v2071
      %v2073 = vpop.f32.mrf.mxu0
      %v2074 = vpop.f32.mrf.mxu0
      %v2075 = vadd.f32 %v1914, %v2074
      %v2076 = vpop.f32.mrf.mxu0
      %2077 = vmatprep.mubr.bf16.mxu0 %v1015
      %2078 = vmatmul.mubr.bf16.gmra.mxu0 %v951
      %v2079 = vpop.f32.mrf.mxu0
      %v2080 = vadd.f32 %v1919, %v2079
      %v2081 = vpop.f32.mrf.mxu0
      %v2082 = vpop.f32.mrf.mxu0
      %v2083 = vadd.f32 %v1922, %v2082
      %v2084 = vpop.f32.mrf.mxu0
      %2085 = vmatprep.mubr.bf16.mxu0 %v1016
      %2086 = vmatmul.mubr.bf16.gmra.mxu0 %v952
      %v2087 = vpop.f32.mrf.mxu0
      %v2088 = vadd.f32 %v1927, %v2087
      %v2089 = vpop.f32.mrf.mxu0
      %v2090 = vpop.f32.mrf.mxu0
      %v2091 = vadd.f32 %v1930, %v2090
      %v2092 = vpop.f32.mrf.mxu0
      %2093 = vmatprep.mubr.bf16.mxu0 %v1017
      %2094 = vmatmul.mubr.bf16.gmra.mxu0 %v953
      %v2095 = vpop.f32.mrf.mxu0
      %v2096 = vadd.f32 %v1935, %v2095
      %v2097 = vpop.f32.mrf.mxu0
      %v2098 = vpop.f32.mrf.mxu0
      %v2099 = vadd.f32 %v1938, %v2098
      %v2100 = vpop.f32.mrf.mxu0
      %2101 = vmatprep.mubr.bf16.mxu0 %v1018
      %2102 = vmatmul.mubr.bf16.gmra.mxu0 %v954
      %v2103 = vpop.f32.mrf.mxu0
      %v2104 = vadd.f32 %v1943, %v2103
      %v2105 = vpop.f32.mrf.mxu0
      %v2106 = vpop.f32.mrf.mxu0
      %v2107 = vadd.f32 %v1946, %v2106
      %v2108 = vpop.f32.mrf.mxu0
      %2109 = vmatprep.mubr.bf16.mxu0 %v1019
      %2110 = vmatmul.mubr.bf16.gmra.mxu0 %v955
      %v2111 = vpop.f32.mrf.mxu0
      %v2112 = vadd.f32 %v1951, %v2111
      %v2113 = vpop.f32.mrf.mxu0
      %v2114 = vpop.f32.mrf.mxu0
      %v2115 = vadd.f32 %v1954, %v2114
      %v2116 = vpop.f32.mrf.mxu0
      %2117 = vmatprep.mubr.bf16.mxu0 %v1046
      %2118 = vmatmul.mubr.bf16.gmra.mxu0 %v1042
      %v2119 = vpop.f32.mrf.mxu0
      %v2120 = vadd.f32 %v1959, %v2119
      %v2121 = vpop.f32.mrf.mxu0
      %v2122 = vpop.f32.mrf.mxu0
      %v2123 = vadd.f32 %v1962, %v2122
      %v2124 = vpop.f32.mrf.mxu0
      %2125 = vdwg.mxu0
      %2126 = vmatprep.subr.bf16.mxu0 0
      %2127 = vmatpush1.bf16.msra.mxu0 %v1554
      %2128 = vmatprep.subr.bf16.mxu0 0
      %2129 = vmatpush1.bf16.msra.mxu0 %v1553
      %2130 = vmatprep.subr.bf16.mxu0 0
      %2131 = vmatpush1.bf16.msra.mxu0 %v1552
      %2132 = vmatprep.subr.bf16.mxu0 0
      %2133 = vmatpush1.bf16.msra.mxu0 %v1551
      %2134 = vmatprep.subr.bf16.mxu0 0
      %2135 = vmatpush1.bf16.msra.mxu0 %v1550
      %2136 = vmatprep.subr.bf16.mxu0 0
      %2137 = vmatpush1.bf16.msra.mxu0 %v1549
      %2138 = vmatprep.subr.bf16.mxu0 0
      %2139 = vmatpush1.bf16.msra.mxu0 %v1548
      %2140 = vmatprep.subr.bf16.mxu0 0
      %2141 = vmatpush1.bf16.msra.mxu0 %v1547
      %2142 = vmatprep.subr.bf16.mxu0 0
      %2143 = vmatpush2.bf16.msra.mxu0 %v1562
      %2144 = vmatprep.subr.bf16.mxu0 0
      %2145 = vmatpush2.bf16.msra.mxu0 %v1561
      %2146 = vmatprep.subr.bf16.mxu0 0
      %2147 = vmatpush2.bf16.msra.mxu0 %v1560
      %2148 = vmatprep.subr.bf16.mxu0 0
      %2149 = vmatpush2.bf16.msra.mxu0 %v1559
      %2150 = vmatprep.subr.bf16.mxu0 0
      %2151 = vmatpush2.bf16.msra.mxu0 %v1558
      %2152 = vmatprep.subr.bf16.mxu0 0
      %2153 = vmatpush2.bf16.msra.mxu0 %v1557
      %2154 = vmatprep.subr.bf16.mxu0 0
      %2155 = vmatpush2.bf16.msra.mxu0 %v1556
      %2156 = vmatprep.subr.bf16.mxu0 0
      %2157 = vmatpush2.bf16.msra.mxu0 %v1555
      %2158 = vmatprep.mubr.bf16.mxu0 %v942
      %2159 = vmatmul.mubr.bf16.gmra.mxu0 %v878
      %v2160 = vpop.f32.mrf.mxu0
      %v2161 = vadd.f32 %v2000, %v2160
      %v2162 = vpop.f32.mrf.mxu0
      %v2163 = vpop.f32.mrf.mxu0
      %v2164 = vadd.f32 %v2003, %v2163
      %v2165 = vpop.f32.mrf.mxu0
      %2166 = vmatprep.mubr.bf16.mxu0 %v943
      %2167 = vmatmul.mubr.bf16.gmra.mxu0 %v879
      %v2168 = vpop.f32.mrf.mxu0
      %v2169 = vadd.f32 %v2008, %v2168
      %v2170 = vpop.f32.mrf.mxu0
      %v2171 = vpop.f32.mrf.mxu0
      %v2172 = vadd.f32 %v2011, %v2171
      %v2173 = vpop.f32.mrf.mxu0
      %2174 = vmatprep.mubr.bf16.mxu0 %v944
      %2175 = vmatmul.mubr.bf16.gmra.mxu0 %v880
      %v2176 = vpop.f32.mrf.mxu0
      %v2177 = vadd.f32 %v2016, %v2176
      %v2178 = vpop.f32.mrf.mxu0
      %v2179 = vpop.f32.mrf.mxu0
      %v2180 = vadd.f32 %v2019, %v2179
      %v2181 = vpop.f32.mrf.mxu0
      %2182 = vmatprep.mubr.bf16.mxu0 %v945
      %2183 = vmatmul.mubr.bf16.gmra.mxu0 %v881
      %v2184 = vpop.f32.mrf.mxu0
      %v2185 = vadd.f32 %v2024, %v2184
      %v2186 = vpop.f32.mrf.mxu0
      %v2187 = vpop.f32.mrf.mxu0
      %v2188 = vadd.f32 %v2027, %v2187
      %v2189 = vpop.f32.mrf.mxu0
      %2190 = vmatprep.mubr.bf16.mxu0 %v946
      %2191 = vmatmul.mubr.bf16.gmra.mxu0 %v882
      %v2192 = vpop.f32.mrf.mxu0
      %v2193 = vadd.f32 %v2032, %v2192
      %v2194 = vpop.f32.mrf.mxu0
      %v2195 = vpop.f32.mrf.mxu0
      %v2196 = vadd.f32 %v2035, %v2195
      %v2197 = vpop.f32.mrf.mxu0
      %2198 = vmatprep.mubr.bf16.mxu0 %v947
      %2199 = vmatmul.mubr.bf16.gmra.mxu0 %v883
      %v2200 = vpop.f32.mrf.mxu0
      %v2201 = vadd.f32 %v2040, %v2200
      %v2202 = vpop.f32.mrf.mxu0
      %v2203 = vpop.f32.mrf.mxu0
      %v2204 = vadd.f32 %v2043, %v2203
      %v2205 = vpop.f32.mrf.mxu0
      %2206 = vmatprep.mubr.bf16.mxu0 %v948
      %2207 = vmatmul.mubr.bf16.gmra.mxu0 %v884
      %v2208 = vpop.f32.mrf.mxu0
      %v2209 = vadd.f32 %v2048, %v2208
      %v2210 = vpop.f32.mrf.mxu0
      %v2211 = vpop.f32.mrf.mxu0
      %v2212 = vadd.f32 %v2051, %v2211
      %v2213 = vpop.f32.mrf.mxu0
      %2214 = vmatprep.mubr.bf16.mxu0 %v949
      %2215 = vmatmul.mubr.bf16.gmra.mxu0 %v885
      %v2216 = vpop.f32.mrf.mxu0
      %v2217 = vadd.f32 %v2056, %v2216
      %v2218 = vpop.f32.mrf.mxu0
      %v2219 = vpop.f32.mrf.mxu0
      %v2220 = vadd.f32 %v2059, %v2219
      %v2221 = vpop.f32.mrf.mxu0
      %2222 = vmatprep.mubr.bf16.mxu0 %v950
      %2223 = vmatmul.mubr.bf16.gmra.mxu0 %v886
      %v2224 = vpop.f32.mrf.mxu0
      %v2225 = vadd.f32 %v2064, %v2224
      %v2226 = vpop.f32.mrf.mxu0
      %v2227 = vpop.f32.mrf.mxu0
      %v2228 = vadd.f32 %v2067, %v2227
      %v2229 = vpop.f32.mrf.mxu0
      %2230 = vmatprep.mubr.bf16.mxu0 %v951
      %2231 = vmatmul.mubr.bf16.gmra.mxu0 %v887
      %v2232 = vpop.f32.mrf.mxu0
      %v2233 = vadd.f32 %v2072, %v2232
      %v2234 = vpop.f32.mrf.mxu0
      %v2235 = vpop.f32.mrf.mxu0
      %v2236 = vadd.f32 %v2075, %v2235
      %v2237 = vpop.f32.mrf.mxu0
      %2238 = vmatprep.mubr.bf16.mxu0 %v952
      %2239 = vmatmul.mubr.bf16.gmra.mxu0 %v888
      %v2240 = vpop.f32.mrf.mxu0
      %v2241 = vadd.f32 %v2080, %v2240
      %v2242 = vpop.f32.mrf.mxu0
      %v2243 = vpop.f32.mrf.mxu0
      %v2244 = vadd.f32 %v2083, %v2243
      %v2245 = vpop.f32.mrf.mxu0
      %2246 = vmatprep.mubr.bf16.mxu0 %v953
      %2247 = vmatmul.mubr.bf16.gmra.mxu0 %v889
      %v2248 = vpop.f32.mrf.mxu0
      %v2249 = vadd.f32 %v2088, %v2248
      %v2250 = vpop.f32.mrf.mxu0
      %v2251 = vpop.f32.mrf.mxu0
      %v2252 = vadd.f32 %v2091, %v2251
      %v2253 = vpop.f32.mrf.mxu0
      %2254 = vmatprep.mubr.bf16.mxu0 %v954
      %2255 = vmatmul.mubr.bf16.gmra.mxu0 %v890
      %v2256 = vpop.f32.mrf.mxu0
      %v2257 = vadd.f32 %v2096, %v2256
      %v2258 = vpop.f32.mrf.mxu0
      %v2259 = vpop.f32.mrf.mxu0
      %v2260 = vadd.f32 %v2099, %v2259
      %v2261 = vpop.f32.mrf.mxu0
      %2262 = vmatprep.mubr.bf16.mxu0 %v955
      %2263 = vmatmul.mubr.bf16.gmra.mxu0 %v891
      %v2264 = vpop.f32.mrf.mxu0
      %v2265 = vadd.f32 %v2104, %v2264
      %v2266 = vpop.f32.mrf.mxu0
      %v2267 = vpop.f32.mrf.mxu0
      %v2268 = vadd.f32 %v2107, %v2267
      %v2269 = vpop.f32.mrf.mxu0
      %2270 = vmatprep.mubr.bf16.mxu0 %v1042
      %2271 = vmatmul.mubr.bf16.gmra.mxu0 %v1038
      %v2272 = vpop.f32.mrf.mxu0
      %v2273 = vadd.f32 %v2112, %v2272
      %v2274 = vpop.f32.mrf.mxu0
      %v2275 = vpop.f32.mrf.mxu0
      %v2276 = vadd.f32 %v2115, %v2275
      %v2277 = vpop.f32.mrf.mxu0
      %2278 = vmatprep.mubr.bf16.mxu0 %v1054
      %2279 = vmatmul.mubr.bf16.gmra.mxu0 %v1050
      %v2280 = vpop.f32.mrf.mxu0
      %v2281 = vadd.f32 %v2120, %v2280
      %v2282 = vpop.f32.mrf.mxu0
      %v2283 = vpop.f32.mrf.mxu0
      %v2284 = vadd.f32 %v2123, %v2283
      %v2285 = vpop.f32.mrf.mxu0
      %2286 = vdwg.mxu0
      %2287 = vmatprep.subr.bf16.mxu0 0
      %2288 = vmatpush1.bf16.msra.mxu0 %v1570
      %2289 = vmatprep.subr.bf16.mxu0 0
      %2290 = vmatpush1.bf16.msra.mxu0 %v1569
      %2291 = vmatprep.subr.bf16.mxu0 0
      %2292 = vmatpush1.bf16.msra.mxu0 %v1568
      %2293 = vmatprep.subr.bf16.mxu0 0
      %2294 = vmatpush1.bf16.msra.mxu0 %v1567
      %2295 = vmatprep.subr.bf16.mxu0 0
      %2296 = vmatpush1.bf16.msra.mxu0 %v1566
      %2297 = vmatprep.subr.bf16.mxu0 0
      %2298 = vmatpush1.bf16.msra.mxu0 %v1565
      %2299 = vmatprep.subr.bf16.mxu0 0
      %2300 = vmatpush1.bf16.msra.mxu0 %v1564
      %2301 = vmatprep.subr.bf16.mxu0 0
      %2302 = vmatpush1.bf16.msra.mxu0 %v1563
      %2303 = vmatprep.subr.bf16.mxu0 0
      %2304 = vmatpush2.bf16.msra.mxu0 0
      %2305 = vmatprep.subr.bf16.mxu0 0
      %2306 = vmatpush2.bf16.msra.mxu0 0
      %2307 = vmatprep.subr.bf16.mxu0 0
      %2308 = vmatpush2.bf16.msra.mxu0 0
      %2309 = vmatprep.subr.bf16.mxu0 0
      %2310 = vmatpush2.bf16.msra.mxu0 0
      %2311 = vmatprep.subr.bf16.mxu0 0
      %2312 = vmatpush2.bf16.msra.mxu0 0
      %2313 = vmatprep.subr.bf16.mxu0 0
      %2314 = vmatpush2.bf16.msra.mxu0 0
      %2315 = vmatprep.subr.bf16.mxu0 0
      %2316 = vmatpush2.bf16.msra.mxu0 0
      %2317 = vmatprep.subr.bf16.mxu0 0
      %2318 = vmatpush2.bf16.msra.mxu0 0
      %2319 = vmatprep.mubr.bf16.mxu0 0
      %2320 = vmatmul.mubr.bf16.gmra.mxu0 %v1006
      %v2321 = vpop.f32.mrf.mxu0
      %v2322 = vadd.f32 %v2161, %v2321
      %v2323 = vpop.f32.mrf.mxu0
      %v2324 = vpop.f32.mrf.mxu0
      %v2325 = vadd.f32 %v2164, %v2324
      %v2326 = vpop.f32.mrf.mxu0
      %2327 = vmatprep.mubr.bf16.mxu0 0
      %2328 = vmatmul.mubr.bf16.gmra.mxu0 %v1007
      %v2329 = vpop.f32.mrf.mxu0
      %v2330 = vadd.f32 %v2169, %v2329
      %v2331 = vpop.f32.mrf.mxu0
      %v2332 = vpop.f32.mrf.mxu0
      %v2333 = vadd.f32 %v2172, %v2332
      %v2334 = vpop.f32.mrf.mxu0
      %2335 = vmatprep.mubr.bf16.mxu0 0
      %2336 = vmatmul.mubr.bf16.gmra.mxu0 %v1008
      %v2337 = vpop.f32.mrf.mxu0
      %v2338 = vadd.f32 %v2177, %v2337
      %v2339 = vpop.f32.mrf.mxu0
      %v2340 = vpop.f32.mrf.mxu0
      %v2341 = vadd.f32 %v2180, %v2340
      %v2342 = vpop.f32.mrf.mxu0
      %2343 = vmatprep.mubr.bf16.mxu0 0
      %2344 = vmatmul.mubr.bf16.gmra.mxu0 %v1009
      %v2345 = vpop.f32.mrf.mxu0
      %v2346 = vadd.f32 %v2185, %v2345
      %v2347 = vpop.f32.mrf.mxu0
      %v2348 = vpop.f32.mrf.mxu0
      %v2349 = vadd.f32 %v2188, %v2348
      %v2350 = vpop.f32.mrf.mxu0
      %2351 = vmatprep.mubr.bf16.mxu0 0
      %2352 = vmatmul.mubr.bf16.gmra.mxu0 %v1010
      %v2353 = vpop.f32.mrf.mxu0
      %v2354 = vadd.f32 %v2193, %v2353
      %v2355 = vpop.f32.mrf.mxu0
      %v2356 = vpop.f32.mrf.mxu0
      %v2357 = vadd.f32 %v2196, %v2356
      %v2358 = vpop.f32.mrf.mxu0
      %2359 = vmatprep.mubr.bf16.mxu0 0
      %2360 = vmatmul.mubr.bf16.gmra.mxu0 %v1011
      %v2361 = vpop.f32.mrf.mxu0
      %v2362 = vadd.f32 %v2201, %v2361
      %v2363 = vpop.f32.mrf.mxu0
      %v2364 = vpop.f32.mrf.mxu0
      %v2365 = vadd.f32 %v2204, %v2364
      %v2366 = vpop.f32.mrf.mxu0
      %2367 = vmatprep.mubr.bf16.mxu0 0
      %2368 = vmatmul.mubr.bf16.gmra.mxu0 %v1012
      %v2369 = vpop.f32.mrf.mxu0
      %v2370 = vadd.f32 %v2209, %v2369
      %v2371 = vpop.f32.mrf.mxu0
      %v2372 = vpop.f32.mrf.mxu0
      %v2373 = vadd.f32 %v2212, %v2372
      %v2374 = vpop.f32.mrf.mxu0
      %2375 = vmatprep.mubr.bf16.mxu0 0
      %2376 = vmatmul.mubr.bf16.gmra.mxu0 %v1013
      %v2377 = vpop.f32.mrf.mxu0
      %v2378 = vadd.f32 %v2217, %v2377
      %v2379 = vpop.f32.mrf.mxu0
      %v2380 = vpop.f32.mrf.mxu0
      %v2381 = vadd.f32 %v2220, %v2380
      %v2382 = vpop.f32.mrf.mxu0
      %2383 = vmatprep.mubr.bf16.mxu0 0
      %2384 = vmatmul.mubr.bf16.gmra.mxu0 %v1014
      %v2385 = vpop.f32.mrf.mxu0
      %v2386 = vadd.f32 %v2225, %v2385
      %v2387 = vpop.f32.mrf.mxu0
      %v2388 = vpop.f32.mrf.mxu0
      %v2389 = vadd.f32 %v2228, %v2388
      %v2390 = vpop.f32.mrf.mxu0
      %2391 = vmatprep.mubr.bf16.mxu0 0
      %2392 = vmatmul.mubr.bf16.gmra.mxu0 %v1015
      %v2393 = vpop.f32.mrf.mxu0
      %v2394 = vadd.f32 %v2233, %v2393
      %v2395 = vpop.f32.mrf.mxu0
      %v2396 = vpop.f32.mrf.mxu0
      %v2397 = vadd.f32 %v2236, %v2396
      %v2398 = vpop.f32.mrf.mxu0
      %2399 = vmatprep.mubr.bf16.mxu0 0
      %2400 = vmatmul.mubr.bf16.gmra.mxu0 %v1016
      %v2401 = vpop.f32.mrf.mxu0
      %v2402 = vadd.f32 %v2241, %v2401
      %v2403 = vpop.f32.mrf.mxu0
      %v2404 = vpop.f32.mrf.mxu0
      %v2405 = vadd.f32 %v2244, %v2404
      %v2406 = vpop.f32.mrf.mxu0
      %2407 = vmatprep.mubr.bf16.mxu0 0
      %2408 = vmatmul.mubr.bf16.gmra.mxu0 %v1017
      %v2409 = vpop.f32.mrf.mxu0
      %v2410 = vadd.f32 %v2249, %v2409
      %v2411 = vpop.f32.mrf.mxu0
      %v2412 = vpop.f32.mrf.mxu0
      %v2413 = vadd.f32 %v2252, %v2412
      %v2414 = vpop.f32.mrf.mxu0
      %2415 = vmatprep.mubr.bf16.mxu0 0
      %2416 = vmatmul.mubr.bf16.gmra.mxu0 %v1018
      %v2417 = vpop.f32.mrf.mxu0
      %v2418 = vadd.f32 %v2257, %v2417
      %v2419 = vpop.f32.mrf.mxu0
      %v2420 = vpop.f32.mrf.mxu0
      %v2421 = vadd.f32 %v2260, %v2420
      %v2422 = vpop.f32.mrf.mxu0
      %2423 = vmatprep.mubr.bf16.mxu0 0
      %2424 = vmatmul.mubr.bf16.gmra.mxu0 %v1019
      %v2425 = vpop.f32.mrf.mxu0
      %v2426 = vadd.f32 %v2265, %v2425
      %v2427 = vpop.f32.mrf.mxu0
      %v2428 = vpop.f32.mrf.mxu0
      %v2429 = vadd.f32 %v2268, %v2428
      %v2430 = vpop.f32.mrf.mxu0
      %2431 = vmatprep.mubr.bf16.mxu0 0
      %2432 = vmatmul.mubr.bf16.gmra.mxu0 %v1046
      %v2433 = vpop.f32.mrf.mxu0
      %v2434 = vadd.f32 %v2273, %v2433
      %v2435 = vpop.f32.mrf.mxu0
      %v2436 = vpop.f32.mrf.mxu0
      %v2437 = vadd.f32 %v2276, %v2436
      %v2438 = vpop.f32.mrf.mxu0
      %2439 = vmatprep.mubr.bf16.mxu0 0
      %2440 = vmatmul.mubr.bf16.gmra.mxu0 %v1058
      %v2441 = vpop.f32.mrf.mxu0
      %v2442 = vadd.f32 %v2281, %v2441
      %v2443 = vpop.f32.mrf.mxu0
      %v2444 = vpop.f32.mrf.mxu0
      %v2445 = vadd.f32 %v2284, %v2444
      %v2446 = vpop.f32.mrf.mxu0
      %2447 = vdwg.mxu0
      %v2448 = vmax.f32 %v2322, 0.0
      %v2449 = vmax.f32 %v2325, 0.0
      %v2450 = vmax.f32 %v2330, 0.0
      %v2451 = vmax.f32 %v2333, 0.0
      %v2452 = vmax.f32 %v2338, 0.0
      %v2453 = vmax.f32 %v2341, 0.0
      %v2454 = vmax.f32 %v2346, 0.0
      %v2455 = vmax.f32 %v2349, 0.0
      %v2456 = vmax.f32 %v2354, 0.0
      %v2457 = vmax.f32 %v2357, 0.0
      %v2458 = vmax.f32 %v2362, 0.0
      %v2459 = vmax.f32 %v2365, 0.0
      %v2460 = vmax.f32 %v2370, 0.0
      %v2461 = vmax.f32 %v2373, 0.0
      %v2462 = vmax.f32 %v2378, 0.0
      %v2463 = vmax.f32 %v2381, 0.0
      %v2464 = vmax.f32 %v2386, 0.0
      %v2465 = vmax.f32 %v2389, 0.0
      %v2466 = vmax.f32 %v2394, 0.0
      %v2467 = vmax.f32 %v2397, 0.0
      %v2468 = vmax.f32 %v2402, 0.0
      %v2469 = vmax.f32 %v2405, 0.0
      %v2470 = vmax.f32 %v2410, 0.0
      %v2471 = vmax.f32 %v2413, 0.0
      %v2472 = vmax.f32 %v2418, 0.0
      %v2473 = vmax.f32 %v2421, 0.0
      %v2474 = vmax.f32 %v2426, 0.0
      %v2475 = vmax.f32 %v2429, 0.0
      %v2476 = vmax.f32 %v2434, 0.0
      %v2477 = vmax.f32 %v2437, 0.0
      %v2478 = vmax.f32 %v2442, 0.0
      %v2479 = vmax.f32 %v2445, 0.0
      %2480 = vst [vmem:[%s170] sm:$0xff] %v2448
      %2481 = vst [vmem:[%s170 + $0x8] sm:$0xff] %v2449
      %2482 = vst [vmem:[%s170 + $0x10] sm:$0xff] %v2450
      %2483 = vst [vmem:[%s170 + $0x18] sm:$0xff] %v2451
      %2484 = vst [vmem:[%s170 + $0x20] sm:$0xff] %v2452
      %2485 = vst [vmem:[%s170 + $0x28] sm:$0xff] %v2453
      %2486 = vst [vmem:[%s170 + $0x30] sm:$0xff] %v2454
      %2487 = vst [vmem:[%s170 + $0x38] sm:$0xff] %v2455
      %2488 = vst [vmem:[%s170 + $0x40] sm:$0xff] %v2456
      %2489 = vst [vmem:[%s170 + $0x48] sm:$0xff] %v2457
      %2490 = vst [vmem:[%s170 + $0x50] sm:$0xff] %v2458
      %2491 = vst [vmem:[%s170 + $0x58] sm:$0xff] %v2459
      %2492 = vst [vmem:[%s170 + $0x60] sm:$0xff] %v2460
      %2493 = vst [vmem:[%s170 + $0x68] sm:$0xff] %v2461
      %2494 = vst [vmem:[%s170 + $0x70] sm:$0xff] %v2462
      %2495 = vst [vmem:[%s170 + $0x78] sm:$0xff] %v2463
      %2496 = vst [vmem:[%s170 + $0x80] sm:$0xff] %v2464
      %2497 = vst [vmem:[%s170 + $0x88] sm:$0xff] %v2465
      %2498 = vst [vmem:[%s170 + $0x90] sm:$0xff] %v2466
      %2499 = vst [vmem:[%s170 + $0x98] sm:$0xff] %v2467
      %2500 = vst [vmem:[%s170 + $0xa0] sm:$0xff] %v2468
      %2501 = vst [vmem:[%s170 + $0xa8] sm:$0xff] %v2469
      %2502 = vst [vmem:[%s170 + $0xb0] sm:$0xff] %v2470
      %2503 = vst [vmem:[%s170 + $0xb8] sm:$0xff] %v2471
      %2504 = vst [vmem:[%s170 + $0xc0] sm:$0xff] %v2472
      %2505 = vst [vmem:[%s170 + $0xc8] sm:$0xff] %v2473
      %2506 = vst [vmem:[%s170 + $0xd0] sm:$0xff] %v2474
      %2507 = vst [vmem:[%s170 + $0xd8] sm:$0xff] %v2475
      %2508 = vst [vmem:[%s170 + $0xe0] sm:$0xff] %v2476
      %2509 = vst [vmem:[%s170 + $0xe8] sm:$0xff] %v2477
      %2510 = vst [vmem:[%s170 + $0xf0] sm:$0xff] %v2478
      %2511 = vst [vmem:[%s170 + $0xf8] sm:$0xff] %v2479
      %p2512 = scmp.lt.s32.totalorder %s14, 1
      %s2513 = scalar_select %p2512, %s14, 1
      %s2514 = smul.addr %s2513, 32
      %s2515 = smul.addr %s2514, 8
      %s2516 = scalar_lea.vmem %s3, %s2515
      // Predicated region
      $region33: #{_lambda_.3} parent=31 // pred_check
        %p2517 = pneg %p100
      $region34: #{_lambda_.3} parent=31 // pred_check_branch
        %2519 = sbr.rel (%p2517) target = $region36
      $region35: #{_lambda_.3} parent=31 // pred_region
        _
      $region36: #{_lambda_.3} parent=31 // pred_fallthru
        _
    $region32: #{_lambda_.3} parent=5 // pred_fallthru
      _
    %p2520 = scmp.le.s32.totalorder 2, %s9
    // Predicated region
    $region37: #{_lambda_.3} parent=5 // pred_check
      %p2521 = pneg %p2520
    $region38: #{_lambda_.3} parent=5 // pred_check_branch
      %2523 = sbr.rel (%p2521) target = $region40
    $region39: #{_lambda_.3} parent=5 // pred_region
      %s2524 = ssub.s32 %s9, 2
      // Predicated region
      $region41: #{_lambda_.3} parent=39 // pred_check
        %p2525 = pneg %p106
      $region42: #{_lambda_.3} parent=39 // pred_check_branch
        %2527 = sbr.rel (%p2525) target = $region44
      $region43: #{_lambda_.3} parent=39 // pred_region
        %p2528 = scmp.lt.s32.totalorder %s15, 1
        %s2529 = scalar_select %p2528, %s15, 1
        %s2530 = smul.addr %s2529, 32
        %s2531 = smul.addr %s2530, 8
        %s2532 = scalar_lea.vmem %s3, %s2531
      $region44: #{_lambda_.3} parent=39 // pred_fallthru
        _
    $region40: #{_lambda_.3} parent=5 // pred_fallthru
      _
  $region6: #{_lambda_.3} parent=0 // loop_footer
    %s13 = sadd.s32 1, %s9
  $region7: #{_lambda_.3} parent=0 // loop_footer_branch
    %8 = sbr.rel target = $region3
  $region8: #{_lambda_.3} parent=0 // loop_exit
    _

</llo_original>
